<compile_context>
chip_gen: v6e
topology: v6e:2x2x1
jax: 0.10.0
libtpu: 0.0.40
codegen_flags: <defaults>
</compile_context>

<pallas_src>
import jax
import jax.numpy as jnp
import numpy as np
from jax import lax
from jax.experimental import pallas as pl
from jax.experimental.pallas import tpu as pltpu


def _round_up(x, m):
    return ((x + m - 1) // m) * m


def pam_pallas(x, wq, bq, wk, bk, wv, bv, gamma, *, tq=None):
    """x: (B, C, W, H) float32 (NCHW, like PyTorch). Returns same shape."""
    B, C, W, H = x.shape
    N = W * H
    Cq = wq.shape[0]                        # = C // 8 in the module
    Cqp = max(8, _round_up(Cq, 8))          # q/k rows padded to sublane multiple
    Cv = _round_up(C + 1, 8)                # v rows + all-ones "denominator" row
    Ctot = 2 * Cqp + Cv                     # fused projection output rows

    # ---- generation-aware tile size / VMEM budget ---------------------------
    try:
        vmem_cap = int(pltpu.get_tpu_info().vmem_capacity_bytes)
    except Exception:
        vmem_cap = None
    if vmem_cap is not None and vmem_cap <= 80 * (1 << 20):   # v7x-class: 64 MiB/TC
        tq_candidates = (256, 128)
        vmem_limit = 56 * (1 << 20)
    elif vmem_cap is not None:                                 # v5e/v6e: 128 MiB
        tq_candidates = (512, 256, 128)
        vmem_limit = 100 * (1 << 20)
    else:                                                      # unknown -> safe config
        tq_candidates = (512, 256, 128)
        vmem_limit = 48 * (1 << 20)

    # Query-tile size: multiple of 128 dividing N (exact softmax per tile),
    # else fall back to a single tile.
    if tq is None:
        tq = next((c for c in tq_candidates if N % c == 0), N)
    elif N % tq != 0 or (tq % 128 != 0 and tq != N):
        tq = N
    n_tq = N // tq

    # NCHW -> (B, C, N): pure reshape (collapse last two dims), no transpose.
    x_cn = x.reshape(B, C, N)

    # Fuse Wq | Wk | Wv into one (Ctot, C) bf16 weight.  Padded q/k rows are
    # zero in BOTH weight and bias (so they add nothing to the energy); the row
    # at v-offset C has zero weights and bias 1.0 -> projects to an all-ones
    # row of V_aug that makes the MXU emit the softmax denominator for free.
    w_fused = jnp.zeros((Ctot, C), dtype=jnp.float32)
    w_fused = w_fused.at[:Cq].set(wq.reshape(Cq, C))
    w_fused = w_fused.at[Cqp:Cqp + Cq].set(wk.reshape(Cq, C))
    w_fused = w_fused.at[2 * Cqp:2 * Cqp + C].set(wv.reshape(C, C))
    w_fused = w_fused.astype(jnp.bfloat16)

    b_fused = jnp.zeros((Ctot,), dtype=jnp.float32)
    b_fused = b_fused.at[:Cq].set(bq)
    b_fused = b_fused.at[Cqp:Cqp + Cq].set(bk)
    b_fused = b_fused.at[2 * Cqp:2 * Cqp + C].set(bv)
    b_fused = b_fused.at[2 * Cqp + C].set(1.0)      # the "ones row" bias
    b_fused = b_fused.reshape(Ctot, 1)              # kept f32 (added post-accum)

    def kernel(x_ref, w_ref, b_ref, gamma_ref, out_ref, q_s, k_s, v_s):
        # x_ref: (C, N) f32 (full image, resident across the query-tile axis)
        # out_ref: (C, tq) f32;  q_s/k_s: (Cqp, N) bf16;  v_s: (Cv, N) bf16.
        # NOTE: correctness relies on the t axis staying sequential
        # ("arbitrary") so the t==0 projection fills scratch before use.
        t = pl.program_id(1)

        # Fused bf16 q/k/v_aug projection, chunked over N so only a
        # (Ctot, tq) f32 slab is ever live (no (Ctot, N) spike).
        @pl.when(t == 0)
        def _():
            def proj_chunk(i, carry):
                o = pl.multiple_of(i * tq, tq)
                xb = x_ref[:, pl.ds(o, tq)].astype(jnp.bfloat16)      # (C, tq)
                qkv = jnp.dot(w_ref[...], xb,
                              preferred_element_type=jnp.float32) + b_ref[...]
                q_s[:, pl.ds(o, tq)] = qkv[0:Cqp, :].astype(jnp.bfloat16)
                k_s[:, pl.ds(o, tq)] = qkv[Cqp:2 * Cqp, :].astype(jnp.bfloat16)
                v_s[:, pl.ds(o, tq)] = qkv[2 * Cqp:, :].astype(jnp.bfloat16)
                return carry
            lax.fori_loop(0, n_tq, proj_chunk, 0)

        off = pl.multiple_of(t * tq, tq)
        qt = q_s[:, pl.ds(off, tq)]                                   # (Cqp, tq)

        # energy[m, n] = <q_:,m , k_:,n>  -> (tq, N); full rows => exact softmax
        energy = lax.dot_general(qt, k_s[...], (((0,), (0,)), ((), ())),
                                 preferred_element_type=jnp.float32)
        e_max = jnp.max(energy, axis=-1, keepdims=True)
        p = jnp.exp(energy - e_max).astype(jnp.bfloat16)              # unnormalized

        # out_aug[c, m] = sum_n v_aug[c, n] * p[m, n]  -> (Cv, tq).
        # Row C of v_aug is all ones, so out_aug[C, :] is the softmax
        # denominator per query (computed on the MXU, already lane-oriented).
        out_aug = lax.dot_general(v_s[...], p, (((1,), (1,)), ((), ())),
                                  preferred_element_type=jnp.float32)

        denom = out_aug[C:C + 1, :]                                   # (1, tq)
        scale = gamma_ref[0, 0] * pl.reciprocal(denom, approx=True)   # gamma/denom
        x_tile = x_ref[:, pl.ds(off, tq)]                             # (C, tq) f32
        out_ref[...] = out_aug[0:C, :] * scale + x_tile

    def build(single_buffer_constants):
        pm = dict(pipeline_mode=pl.Buffered(1)) if single_buffer_constants else {}
        return pl.pallas_call(
            kernel,
            out_shape=jax.ShapeDtypeStruct((B, C, N), x.dtype),
            grid_spec=pltpu.PrefetchScalarGridSpec(
                num_scalar_prefetch=0,
                grid=(B, n_tq),
                in_specs=[
                    # full image; block index constant along t -> resident;
                    # single-buffered (only re-fetched when b changes).
                    pl.BlockSpec((None, C, N), lambda b, t: (b, 0, 0), **pm),
                    pl.BlockSpec((Ctot, C), lambda b, t: (0, 0), **pm),   # fused W (bf16)
                    pl.BlockSpec((Ctot, 1), lambda b, t: (0, 0), **pm),   # fused bias (f32)
                    pl.BlockSpec(memory_space=pltpu.MemorySpace.SMEM),    # gamma
                ],
                out_specs=pl.BlockSpec((None, C, tq), lambda b, t: (b, 0, t)),
                scratch_shapes=[
                    pltpu.VMEM((Cqp, N), jnp.bfloat16),                   # q
                    pltpu.VMEM((Cqp, N), jnp.bfloat16),                   # k
                    pltpu.VMEM((Cv, N), jnp.bfloat16),                    # v + ones row
                ],
            ),
            compiler_params=pltpu.CompilerParams(
                # batch tiles are independent -> shard across TCs; query-tile
                # axis must stay sequential (scratch reuse across it).
                dimension_semantics=("parallel", "arbitrary"),
                vmem_limit_bytes=int(vmem_limit),
            ),
        )

    gamma2 = gamma.reshape(1, 1).astype(jnp.float32)
    try:
        out_cn = build(True)(x_cn, w_fused, b_fused, gamma2)
    except Exception:
        # pipeline_mode / Buffered(1) unavailable on this jax version:
        # fall back to default double buffering (identical numerics).
        out_cn = build(False)(x_cn, w_fused, b_fused, gamma2)

    # (B, C, N) -> NCHW: pure reshape, no transpose.
    return out_cn.reshape(B, C, W, H)


def pam_reference(x, wq, bq, wk, bk, wv, bv, gamma):
    """Pure-JAX f32 replica of the PyTorch forward (for verification)."""
    B, C, W, H = x.shape
    N = W * H

    def conv1x1(x, w, b):
        w2 = w.reshape(w.shape[0], C)
        return jnp.einsum('bchw,oc->bohw', x, w2) + b[None, :, None, None]

    proj_q = conv1x1(x, wq, bq).reshape(B, -1, N).transpose(0, 2, 1)  # (B, N, Cq)
    proj_k = conv1x1(x, wk, bk).reshape(B, -1, N)                     # (B, Cq, N)
    energy = jnp.einsum('bnc,bcm->bnm', proj_q, proj_k)               # (B, N, N)
    attn = jax.nn.softmax(energy, axis=-1)
    proj_v = conv1x1(x, wv, bv).reshape(B, -1, N)                     # (B, C, N)
    out = jnp.einsum('bcn,bmn->bcm', proj_v, attn)                    # (B, C, N)
    out = out.reshape(B, C, W, H)
    return gamma[0] * out + x


if __name__ == "__main__":
    # Small shapes consistent with the module: in_dim >= 8 so C // 8 >= 1.
    B, C, W, H = 2, 16, 16, 16
    Cq = C // 8

    key = jax.random.PRNGKey(0)
    kx, kq, kbq, kk, kbk, kv, kbv = jax.random.split(key, 7)

    x = jax.random.normal(kx, (B, C, W, H), dtype=jnp.float32)

    # Conv2d(.,.,kernel_size=1) parameter shapes from __init__.
    wq = 0.1 * jax.random.normal(kq, (Cq, C, 1, 1), dtype=jnp.float32)
    bq = 0.1 * jax.random.normal(kbq, (Cq,), dtype=jnp.float32)
    wk = 0.1 * jax.random.normal(kk, (Cq, C, 1, 1), dtype=jnp.float32)
    bk = 0.1 * jax.random.normal(kbk, (Cq,), dtype=jnp.float32)
    wv = 0.1 * jax.random.normal(kv, (C, C, 1, 1), dtype=jnp.float32)
    bv = 0.1 * jax.random.normal(kbv, (C,), dtype=jnp.float32)
    # gamma is zeros(1) in __init__; use a nonzero value so the attention path
    # actually contributes to the checked output.
    gamma = jnp.array([0.5], dtype=jnp.float32)

    # tq=128 with N=256 exercises the multi-tile (query-tiled + chunked
    # projection) path.
    out = pam_pallas(x, wq, bq, wk, bk, wv, bv, gamma, tq=128)
    out = jax.block_until_ready(out)

    ref = pam_reference(x, wq, bq, wk, bk, wv, bv, gamma)
    # bf16 MXU inputs + approx reciprocal => relaxed tolerance (intentional).
    np.testing.assert_allclose(np.asarray(out), np.asarray(ref),
                               rtol=2e-2, atol=2e-2)
    print("KERNEL_OK")
</pallas_src>

<mosaic_0001>
module attributes {stable_mosaic.version = 11 : i64} {
  func.func @kernel(%arg0: i32, %arg1: i32, %arg2: memref<1x16x256xf32, #tpu.memory_space<vmem>>, %arg3: memref<40x16xbf16, #tpu.memory_space<vmem>>, %arg4: memref<40x1xf32, #tpu.memory_space<vmem>>, %arg5: memref<1x1xf32, #tpu.memory_space<smem>>, %arg6: memref<1x16x128xf32, #tpu.memory_space<vmem>>, %arg7: memref<8x256xbf16, #tpu.memory_space<vmem>>, %arg8: memref<8x256xbf16, #tpu.memory_space<vmem>>, %arg9: memref<24x256xbf16, #tpu.memory_space<vmem>>) attributes {dimension_semantics = [#tpu.dimension_semantics<parallel>, #tpu.dimension_semantics<arbitrary>], iteration_bounds = array<i64: 2, 2>, scalar_prefetch = 0 : i64, scratch_operands = 3 : i64, tpu.core_type = #tpu.core_type<tc>, window_params = [{pipeline_mode = #tpu.pipeline_mode<synchronous>, transform_indices = @transform_0, window_bounds = array<i64: 1, 16, 256>}, {pipeline_mode = #tpu.pipeline_mode<synchronous>, transform_indices = @transform_1, window_bounds = array<i64: 40, 16>}, {pipeline_mode = #tpu.pipeline_mode<synchronous>, transform_indices = @transform_2, window_bounds = array<i64: 40, 1>}, {transform_indices = @transform_3, window_bounds = array<i64: 1, 1>}, {transform_indices = @transform_4, window_bounds = array<i64: 1, 16, 128>}]} {
    %c0_i32 = arith.constant 0 : i32
    %0 = arith.cmpi eq, %arg1, %c0_i32 : i32
    %1 = arith.extui %0 : i1 to i32
    %c0_i32_0 = arith.constant 0 : i32
    %2 = arith.cmpi ne, %1, %c0_i32_0 : i32
    scf.if %2 {
      %c0_i32_14 = arith.constant 0 : i32
      %c2_i32 = arith.constant 2 : i32
      %32 = arith.addi %c0_i32_14, %c2_i32 : i32
      %c1_i32 = arith.constant 1 : i32
      scf.for %arg10 = %c0_i32_14 to %32 step %c1_i32  : i32 {
        %c128_i32_16 = arith.constant 128 : i32
        %33 = arith.muli %arg10, %c128_i32_16 : i32
        %34 = tpu.assume_multiple %33, 128 : i32
        %c0_17 = arith.constant 0 : index
        %c0_18 = arith.constant 0 : index
        %35 = arith.index_cast %34 : i32 to index
        %36 = vector.load %arg2[%c0_17, %c0_18, %35] : memref<1x16x256xf32, #tpu.memory_space<vmem>>, vector<1x16x128xf32>
        %37 = vector.shape_cast %36 : vector<1x16x128xf32> to vector<16x128xf32>
        %38 = arith.truncf %37 : vector<16x128xf32> to vector<16x128xbf16>
        %c0_19 = arith.constant 0 : index
        %c0_20 = arith.constant 0 : index
        %39 = vector.load %arg3[%c0_19, %c0_20] : memref<40x16xbf16, #tpu.memory_space<vmem>>, vector<40x16xbf16>
        %cst_21 = arith.constant dense<0.000000e+00> : vector<40x128xf32>
        %40 = tpu.matmul %39, %38, %cst_21 {dimension_numbers = #tpu.dot_dimension_numbers<[1], [0], [0], [1], [0, 0, 1, 1], [], []>} : vector<40x16xbf16>, vector<16x128xbf16>, vector<40x128xf32> -> vector<40x128xf32>
        %c0_22 = arith.constant 0 : index
        %c0_23 = arith.constant 0 : index
        %41 = vector.load %arg4[%c0_22, %c0_23] : memref<40x1xf32, #tpu.memory_space<vmem>>, vector<40x1xf32>
        %42 = vector.broadcast %41 : vector<40x1xf32> to vector<40x128xf32>
        %43 = arith.addf %40, %42 : vector<40x128xf32>
        %44 = vector.extract_strided_slice %43 {offsets = [0, 0], sizes = [8, 128], strides = [1, 1]} : vector<40x128xf32> to vector<8x128xf32>
        %45 = arith.truncf %44 : vector<8x128xf32> to vector<8x128xbf16>
        %c0_24 = arith.constant 0 : index
        %46 = arith.index_cast %34 : i32 to index
        %47 = vector.load %arg7[%c0_24, %46] : memref<8x256xbf16, #tpu.memory_space<vmem>>, vector<8x128xbf16>
        tpu.vector_store %arg7[%c0_24, %46], %45 {strides = array<i32>} : memref<8x256xbf16, #tpu.memory_space<vmem>>, vector<8x128xbf16>,
        %48 = vector.extract_strided_slice %43 {offsets = [8, 0], sizes = [8, 128], strides = [1, 1]} : vector<40x128xf32> to vector<8x128xf32>
        %49 = arith.truncf %48 : vector<8x128xf32> to vector<8x128xbf16>
        %c0_25 = arith.constant 0 : index
        %50 = arith.index_cast %34 : i32 to index
        %51 = vector.load %arg8[%c0_25, %50] : memref<8x256xbf16, #tpu.memory_space<vmem>>, vector<8x128xbf16>
        tpu.vector_store %arg8[%c0_25, %50], %49 {strides = array<i32>} : memref<8x256xbf16, #tpu.memory_space<vmem>>, vector<8x128xbf16>,
        %52 = vector.extract_strided_slice %43 {offsets = [16, 0], sizes = [24, 128], strides = [1, 1]} : vector<40x128xf32> to vector<24x128xf32>
        %53 = arith.truncf %52 : vector<24x128xf32> to vector<24x128xbf16>
        %c0_26 = arith.constant 0 : index
        %54 = arith.index_cast %34 : i32 to index
        %55 = vector.load %arg9[%c0_26, %54] : memref<24x256xbf16, #tpu.memory_space<vmem>>, vector<24x128xbf16>
        tpu.vector_store %arg9[%c0_26, %54], %53 {strides = array<i32>} : memref<24x256xbf16, #tpu.memory_space<vmem>>, vector<24x128xbf16>,
      }
      %c2_i32_15 = arith.constant 2 : i32
    } else {
    }
    %c128_i32 = arith.constant 128 : i32
    %3 = arith.muli %arg1, %c128_i32 : i32
    %4 = tpu.assume_multiple %3, 128 : i32
    %c0 = arith.constant 0 : index
    %5 = arith.index_cast %4 : i32 to index
    %6 = vector.load %arg7[%c0, %5] : memref<8x256xbf16, #tpu.memory_space<vmem>>, vector<8x128xbf16>
    %c0_1 = arith.constant 0 : index
    %c0_2 = arith.constant 0 : index
    %7 = vector.load %arg8[%c0_1, %c0_2] : memref<8x256xbf16, #tpu.memory_space<vmem>>, vector<8x256xbf16>
    %cst = arith.constant dense<0.000000e+00> : vector<128x256xf32>
    %8 = tpu.matmul %6, %7, %cst {dimension_numbers = #tpu.dot_dimension_numbers<[0], [0], [1], [1], [0, 1, 1, 1], [], []>} : vector<8x128xbf16>, vector<8x256xbf16>, vector<128x256xf32> -> vector<128x256xf32>
    %cst_3 = arith.constant dense<0xFF800000> : vector<128xf32>
    %9 = vector.multi_reduction <maximumf>, %8, %cst_3 [1] : vector<128x256xf32> to vector<128xf32>
    %10 = vector.shape_cast %9 : vector<128xf32> to vector<128x1xf32>
    %11 = vector.broadcast %10 : vector<128x1xf32> to vector<128x256xf32>
    %12 = arith.subf %8, %11 : vector<128x256xf32>
    %13 = math.exp %12 : vector<128x256xf32>
    %14 = arith.truncf %13 : vector<128x256xf32> to vector<128x256xbf16>
    %c0_4 = arith.constant 0 : index
    %c0_5 = arith.constant 0 : index
    %15 = vector.load %arg9[%c0_4, %c0_5] : memref<24x256xbf16, #tpu.memory_space<vmem>>, vector<24x256xbf16>
    %cst_6 = arith.constant dense<0.000000e+00> : vector<24x128xf32>
    %16 = tpu.matmul %15, %14, %cst_6 {dimension_numbers = #tpu.dot_dimension_numbers<[1], [1], [0], [0], [0, 0, 1, 0], [], []>} : vector<24x256xbf16>, vector<128x256xbf16>, vector<24x128xf32> -> vector<24x128xf32>
    %17 = vector.extract_strided_slice %16 {offsets = [16, 0], sizes = [1, 128], strides = [1, 1]} : vector<24x128xf32> to vector<1x128xf32>
    %c0_7 = arith.constant 0 : index
    %c0_8 = arith.constant 0 : index
    %18 = memref.load %arg5[%c0_7, %c0_8] : memref<1x1xf32, #tpu.memory_space<smem>>
    %19 = tpu.reciprocal %17 {approx = true} : vector<1x128xf32> -> vector<1x128xf32>
    %20 = vector.broadcast %18 : f32 to vector<1x128xf32>
    %21 = arith.mulf %20, %19 : vector<1x128xf32>
    %c0_9 = arith.constant 0 : index
    %c0_10 = arith.constant 0 : index
    %22 = arith.index_cast %4 : i32 to index
    %23 = vector.load %arg2[%c0_9, %c0_10, %22] : memref<1x16x256xf32, #tpu.memory_space<vmem>>, vector<1x16x128xf32>
    %24 = vector.shape_cast %23 : vector<1x16x128xf32> to vector<16x128xf32>
    %25 = vector.extract_strided_slice %16 {offsets = [0, 0], sizes = [16, 128], strides = [1, 1]} : vector<24x128xf32> to vector<16x128xf32>
    %26 = vector.broadcast %21 : vector<1x128xf32> to vector<16x128xf32>
    %27 = arith.mulf %25, %26 : vector<16x128xf32>
    %28 = arith.addf %27, %24 : vector<16x128xf32>
    %c0_11 = arith.constant 0 : index
    %c0_12 = arith.constant 0 : index
    %c0_13 = arith.constant 0 : index
    %29 = vector.load %arg6[%c0_11, %c0_12, %c0_13] : memref<1x16x128xf32, #tpu.memory_space<vmem>>, vector<1x16x128xf32>
    %30 = vector.shape_cast %29 : vector<1x16x128xf32> to vector<16x128xf32>
    %31 = vector.shape_cast %28 : vector<16x128xf32> to vector<1x16x128xf32>
    tpu.vector_store %arg6[%c0_11, %c0_12, %c0_13], %31 {strides = array<i32>} : memref<1x16x128xf32, #tpu.memory_space<vmem>>, vector<1x16x128xf32>,
    return
  }
  func.func @transform_0(%arg0: i32, %arg1: i32) -> (i32, i32, i32) {
    %c0_i32 = arith.constant 0 : i32
    %c0_i32_0 = arith.constant 0 : i32
    %c0_i32_1 = arith.constant 0 : i32
    return %arg0, %c0_i32, %c0_i32_0 : i32, i32, i32
  }
  func.func @transform_1(%arg0: i32, %arg1: i32) -> (i32, i32) {
    %c0_i32 = arith.constant 0 : i32
    %c0_i32_0 = arith.constant 0 : i32
    %c0_i32_1 = arith.constant 0 : i32
    return %c0_i32, %c0_i32_0 : i32, i32
  }
  func.func @transform_2(%arg0: i32, %arg1: i32) -> (i32, i32) {
    %c0_i32 = arith.constant 0 : i32
    %c0_i32_0 = arith.constant 0 : i32
    %c0_i32_1 = arith.constant 0 : i32
    return %c0_i32, %c0_i32_0 : i32, i32
  }
  func.func @transform_3(%arg0: i32, %arg1: i32) -> (i32, i32) {
    %c0_i32 = arith.constant 0 : i32
    %c0_i32_0 = arith.constant 0 : i32
    %c0_i32_1 = arith.constant 0 : i32
    return %c0_i32, %c0_i32_0 : i32, i32
  }
  func.func @transform_4(%arg0: i32, %arg1: i32) -> (i32, i32, i32) {
    %c0_i32 = arith.constant 0 : i32
    %c0_i32_0 = arith.constant 0 : i32
    return %arg0, %c0_i32, %arg1 : i32, i32, i32
  }
}

module attributes {stable_mosaic.version = 11 : i64} {
  func.func @kernel(%arg0: i32, %arg1: i32, %arg2: memref<1x16x256xf32, #tpu.memory_space<vmem>>, %arg3: memref<40x16xbf16, #tpu.memory_space<vmem>>, %arg4: memref<40x1xf32, #tpu.memory_space<vmem>>, %arg5: memref<1x1xf32, #tpu.memory_space<smem>>, %arg6: memref<1x16x128xf32, #tpu.memory_space<vmem>>, %arg7: memref<8x256xbf16, #tpu.memory_space<vmem>>, %arg8: memref<8x256xbf16, #tpu.memory_space<vmem>>, %arg9: memref<24x256xbf16, #tpu.memory_space<vmem>>) attributes {dimension_semantics = [#tpu.dimension_semantics<parallel>, #tpu.dimension_semantics<arbitrary>], iteration_bounds = array<i64: 2, 2>, scalar_prefetch = 0 : i64, scratch_operands = 3 : i64, tpu.core_type = #tpu.core_type<tc>, window_params = [{transform_indices = @transform_0, window_bounds = array<i64: 1, 16, 256>}, {pipeline_mode = #tpu.pipeline_mode<synchronous>, transform_indices = @transform_1, window_bounds = array<i64: 40, 16>}, {pipeline_mode = #tpu.pipeline_mode<synchronous>, transform_indices = @transform_2, window_bounds = array<i64: 40, 1>}, {transform_indices = @transform_3, window_bounds = array<i64: 1, 1>}, {transform_indices = @transform_4, window_bounds = array<i64: 1, 16, 128>}]} {
    %c0_i32 = arith.constant 0 : i32
    %0 = arith.cmpi eq, %arg1, %c0_i32 : i32
    %1 = arith.extui %0 : i1 to i32
    %c0_i32_0 = arith.constant 0 : i32
    %2 = arith.cmpi ne, %1, %c0_i32_0 : i32
    scf.if %2 {
      %c0_i32_14 = arith.constant 0 : i32
      %c2_i32 = arith.constant 2 : i32
      %32 = arith.addi %c0_i32_14, %c2_i32 : i32
      %c1_i32 = arith.constant 1 : i32
      scf.for %arg10 = %c0_i32_14 to %32 step %c1_i32  : i32 {
        %c128_i32_16 = arith.constant 128 : i32
        %33 = arith.muli %arg10, %c128_i32_16 : i32
        %34 = tpu.assume_multiple %33, 128 : i32
        %c0_17 = arith.constant 0 : index
        %c0_18 = arith.constant 0 : index
        %35 = arith.index_cast %34 : i32 to index
        %36 = vector.load %arg2[%c0_17, %c0_18, %35] : memref<1x16x256xf32, #tpu.memory_space<vmem>>, vector<1x16x128xf32>
        %37 = vector.shape_cast %36 : vector<1x16x128xf32> to vector<16x128xf32>
        %38 = arith.truncf %37 : vector<16x128xf32> to vector<16x128xbf16>
        %c0_19 = arith.constant 0 : index
        %c0_20 = arith.constant 0 : index
        %39 = vector.load %arg3[%c0_19, %c0_20] : memref<40x16xbf16, #tpu.memory_space<vmem>>, vector<40x16xbf16>
        %cst_21 = arith.constant dense<0.000000e+00> : vector<40x128xf32>
        %40 = tpu.matmul %39, %38, %cst_21 {dimension_numbers = #tpu.dot_dimension_numbers<[1], [0], [0], [1], [0, 0, 1, 1], [], []>} : vector<40x16xbf16>, vector<16x128xbf16>, vector<40x128xf32> -> vector<40x128xf32>
        %c0_22 = arith.constant 0 : index
        %c0_23 = arith.constant 0 : index
        %41 = vector.load %arg4[%c0_22, %c0_23] : memref<40x1xf32, #tpu.memory_space<vmem>>, vector<40x1xf32>
        %42 = vector.broadcast %41 : vector<40x1xf32> to vector<40x128xf32>
        %43 = arith.addf %40, %42 : vector<40x128xf32>
        %44 = vector.extract_strided_slice %43 {offsets = [0, 0], sizes = [8, 128], strides = [1, 1]} : vector<40x128xf32> to vector<8x128xf32>
        %45 = arith.truncf %44 : vector<8x128xf32> to vector<8x128xbf16>
        %c0_24 = arith.constant 0 : index
        %46 = arith.index_cast %34 : i32 to index
        %47 = vector.load %arg7[%c0_24, %46] : memref<8x256xbf16, #tpu.memory_space<vmem>>, vector<8x128xbf16>
        tpu.vector_store %arg7[%c0_24, %46], %45 {strides = array<i32>} : memref<8x256xbf16, #tpu.memory_space<vmem>>, vector<8x128xbf16>,
        %48 = vector.extract_strided_slice %43 {offsets = [8, 0], sizes = [8, 128], strides = [1, 1]} : vector<40x128xf32> to vector<8x128xf32>
        %49 = arith.truncf %48 : vector<8x128xf32> to vector<8x128xbf16>
        %c0_25 = arith.constant 0 : index
        %50 = arith.index_cast %34 : i32 to index
        %51 = vector.load %arg8[%c0_25, %50] : memref<8x256xbf16, #tpu.memory_space<vmem>>, vector<8x128xbf16>
        tpu.vector_store %arg8[%c0_25, %50], %49 {strides = array<i32>} : memref<8x256xbf16, #tpu.memory_space<vmem>>, vector<8x128xbf16>,
        %52 = vector.extract_strided_slice %43 {offsets = [16, 0], sizes = [24, 128], strides = [1, 1]} : vector<40x128xf32> to vector<24x128xf32>
        %53 = arith.truncf %52 : vector<24x128xf32> to vector<24x128xbf16>
        %c0_26 = arith.constant 0 : index
        %54 = arith.index_cast %34 : i32 to index
        %55 = vector.load %arg9[%c0_26, %54] : memref<24x256xbf16, #tpu.memory_space<vmem>>, vector<24x128xbf16>
        tpu.vector_store %arg9[%c0_26, %54], %53 {strides = array<i32>} : memref<24x256xbf16, #tpu.memory_space<vmem>>, vector<24x128xbf16>,
      }
      %c2_i32_15 = arith.constant 2 : i32
    } else {
    }
    %c128_i32 = arith.constant 128 : i32
    %3 = arith.muli %arg1, %c128_i32 : i32
    %4 = tpu.assume_multiple %3, 128 : i32
    %c0 = arith.constant 0 : index
    %5 = arith.index_cast %4 : i32 to index
    %6 = vector.load %arg7[%c0, %5] : memref<8x256xbf16, #tpu.memory_space<vmem>>, vector<8x128xbf16>
    %c0_1 = arith.constant 0 : index
    %c0_2 = arith.constant 0 : index
    %7 = vector.load %arg8[%c0_1, %c0_2] : memref<8x256xbf16, #tpu.memory_space<vmem>>, vector<8x256xbf16>
    %cst = arith.constant dense<0.000000e+00> : vector<128x256xf32>
    %8 = tpu.matmul %6, %7, %cst {dimension_numbers = #tpu.dot_dimension_numbers<[0], [0], [1], [1], [0, 1, 1, 1], [], []>} : vector<8x128xbf16>, vector<8x256xbf16>, vector<128x256xf32> -> vector<128x256xf32>
    %cst_3 = arith.constant dense<0xFF800000> : vector<128xf32>
    %9 = vector.multi_reduction <maximumf>, %8, %cst_3 [1] : vector<128x256xf32> to vector<128xf32>
    %10 = vector.shape_cast %9 : vector<128xf32> to vector<128x1xf32>
    %11 = vector.broadcast %10 : vector<128x1xf32> to vector<128x256xf32>
    %12 = arith.subf %8, %11 : vector<128x256xf32>
    %13 = math.exp %12 : vector<128x256xf32>
    %14 = arith.truncf %13 : vector<128x256xf32> to vector<128x256xbf16>
    %c0_4 = arith.constant 0 : index
    %c0_5 = arith.constant 0 : index
    %15 = vector.load %arg9[%c0_4, %c0_5] : memref<24x256xbf16, #tpu.memory_space<vmem>>, vector<24x256xbf16>
    %cst_6 = arith.constant dense<0.000000e+00> : vector<24x128xf32>
    %16 = tpu.matmul %15, %14, %cst_6 {dimension_numbers = #tpu.dot_dimension_numbers<[1], [1], [0], [0], [0, 0, 1, 0], [], []>} : vector<24x256xbf16>, vector<128x256xbf16>, vector<24x128xf32> -> vector<24x128xf32>
    %17 = vector.extract_strided_slice %16 {offsets = [16, 0], sizes = [1, 128], strides = [1, 1]} : vector<24x128xf32> to vector<1x128xf32>
    %c0_7 = arith.constant 0 : index
    %c0_8 = arith.constant 0 : index
    %18 = memref.load %arg5[%c0_7, %c0_8] : memref<1x1xf32, #tpu.memory_space<smem>>
    %19 = tpu.reciprocal %17 {approx = true} : vector<1x128xf32> -> vector<1x128xf32>
    %20 = vector.broadcast %18 : f32 to vector<1x128xf32>
    %21 = arith.mulf %20, %19 : vector<1x128xf32>
    %c0_9 = arith.constant 0 : index
    %c0_10 = arith.constant 0 : index
    %22 = arith.index_cast %4 : i32 to index
    %23 = vector.load %arg2[%c0_9, %c0_10, %22] : memref<1x16x256xf32, #tpu.memory_space<vmem>>, vector<1x16x128xf32>
    %24 = vector.shape_cast %23 : vector<1x16x128xf32> to vector<16x128xf32>
    %25 = vector.extract_strided_slice %16 {offsets = [0, 0], sizes = [16, 128], strides = [1, 1]} : vector<24x128xf32> to vector<16x128xf32>
    %26 = vector.broadcast %21 : vector<1x128xf32> to vector<16x128xf32>
    %27 = arith.mulf %25, %26 : vector<16x128xf32>
    %28 = arith.addf %27, %24 : vector<16x128xf32>
    %c0_11 = arith.constant 0 : index
    %c0_12 = arith.constant 0 : index
    %c0_13 = arith.constant 0 : index
    %29 = vector.load %arg6[%c0_11, %c0_12, %c0_13] : memref<1x16x128xf32, #tpu.memory_space<vmem>>, vector<1x16x128xf32>
    %30 = vector.shape_cast %29 : vector<1x16x128xf32> to vector<16x128xf32>
    %31 = vector.shape_cast %28 : vector<16x128xf32> to vector<1x16x128xf32>
    tpu.vector_store %arg6[%c0_11, %c0_12, %c0_13], %31 {strides = array<i32>} : memref<1x16x128xf32, #tpu.memory_space<vmem>>, vector<1x16x128xf32>,
    return
  }
  func.func @transform_0(%arg0: i32, %arg1: i32) -> (i32, i32, i32) {
    %c0_i32 = arith.constant 0 : i32
    %c0_i32_0 = arith.constant 0 : i32
    %c0_i32_1 = arith.constant 0 : i32
    return %arg0, %c0_i32, %c0_i32_0 : i32, i32, i32
  }
  func.func @transform_1(%arg0: i32, %arg1: i32) -> (i32, i32) {
    %c0_i32 = arith.constant 0 : i32
    %c0_i32_0 = arith.constant 0 : i32
    %c0_i32_1 = arith.constant 0 : i32
    return %c0_i32, %c0_i32_0 : i32, i32
  }
  func.func @transform_2(%arg0: i32, %arg1: i32) -> (i32, i32) {
    %c0_i32 = arith.constant 0 : i32
    %c0_i32_0 = arith.constant 0 : i32
    %c0_i32_1 = arith.constant 0 : i32
    return %c0_i32, %c0_i32_0 : i32, i32
  }
  func.func @transform_3(%arg0: i32, %arg1: i32) -> (i32, i32) {
    %c0_i32 = arith.constant 0 : i32
    %c0_i32_0 = arith.constant 0 : i32
    %c0_i32_1 = arith.constant 0 : i32
    return %c0_i32, %c0_i32_0 : i32, i32
  }
  func.func @transform_4(%arg0: i32, %arg1: i32) -> (i32, i32, i32) {
    %c0_i32 = arith.constant 0 : i32
    %c0_i32_0 = arith.constant 0 : i32
    return %arg0, %c0_i32, %arg1 : i32, i32, i32
  }
}

</mosaic_0001>

<llo_original>
// kernel: tpu_custom_call.1
$region0: #{tpu_custom_call.1}
  #allocation0 [shape = 'u32[]', space=smem, size = 0x4, offset = 0x4, fixed_abs, tag = 'smem constant byte address 0x4 - core index']
  #allocation1 [shape = 'u32[144,128]{1,0:T(1,128)}', space=vmem, size = 0x12000, scoped, tag = 'internal scratch']
  #allocation2 [shape = 'bf16[8,256]{1,0:T(8,128)(2,1)}', space=vmem, size = 0x1000, scoped, tag = 'scratch operand']
  #allocation3 [shape = 'bf16[8,256]{1,0:T(8,128)(2,1)}', space=vmem, size = 0x1000, scoped, tag = 'scratch operand']
  #allocation4 [shape = 'bf16[24,256]{1,0:T(8,128)(2,1)}', space=vmem, size = 0x3000, scoped, tag = 'scratch operand']
  #allocation5 [shape = 'f32[1,1]{1,0:T(1,128)S(6)}', space=smem, size = 0x200, scoped, tag = 'scoped memory for tpu_custom_call.1']
  %s0 = inlined_call_operand.vmem [shape: f32[2,16,256], index: 0, kind: input, shape index: {}]
  %s1 = inlined_call_operand.vmem [shape: bf16[40,16], index: 1, kind: input, shape index: {}]
  %s2 = inlined_call_operand.vmem [shape: f32[40,1], index: 2, kind: input, shape index: {}]
  %s3 = inlined_call_operand.<no memory space> [shape: f32[1,1], index: 3, kind: input, shape index: {}]
  %s4 = inlined_call_operand.hbm [shape: f32[2,16,256], index: 4, kind: output, shape index: {}]
  %s5 = sld [smem:[#allocation0]]
  $region60: #{tpu_custom_call.1} parent=0
    _
  %s7 = ssub.s32 1, %s5
  %s8 = scalar_select 0, %s7, %s5
  %9 = sst [smem:[#allocation5]] %s3
  $region1: #{tpu_custom_call.1} parent=0
    #allocation6 [shape = 'u8[16384]{0}', space=vmem, size = 0x4000, scoped, tag = 'output window, operand 0']
    #allocation7 [shape = 's32[2]{0}', space=sflag, size = 0x8, scoped, tag = 'scoped memory for tpu_custom_call.1']
    %10 = vsyncpa [#allocation7], 0
    %s11 = scalar_lea.sflag [#allocation7], 1
    %12 = vsyncpa %s11, 0
    loop: start=0, step=1, limit=6
    $region2: #{tpu_custom_call.1} parent=1 // loop_pre_header
      _
    $region3: #{tpu_custom_call.1} parent=1 // loop_header
      %s14 = sphi 0, %s18
      %p15 = scmp.ge.s32.totalorder %s14, 6
      %s21 = sphi 0, %s33
      %s22 = sphi 0, %s29
      %s23 = sphi 0, %s21
      %s24 = sphi 0, %s22
      %s25 = sphi 0, %s23
      %s26 = sphi 0, %s24
      %s36 = sphi 0, %s38
      %s39 = sphi 0, %s36
      %s40 = sphi 0, %s39
      %s56 = sphi 0, %s40
      %s60 = sphi 0, %s60
      %s62 = sphi 0, %s60
      %s63 = sphi 0, %s62
      %s77 = sphi 0, %s63
      %s81 = sphi 0, %s81
      %s83 = sphi 0, %s81
      %s84 = sphi 0, %s83
      %s98 = sphi 0, %s84
      %s102 = sphi 0, %s102
      %s104 = sphi 0, %s102
      %s105 = sphi 0, %s104
      %s119 = sphi 0, %s105
      %s127 = sphi 0, %s129
      %s130 = sphi 0, %s127
      %s131 = sphi 0, %s130
      %s147 = sphi 0, %s131
    $region4: #{tpu_custom_call.1} parent=1 // loop_header_branch
      %17 = sbr.rel (%p15) target = $region8
    $region5: #{tpu_custom_call.1} parent=1 // loop_body
      %s19 = ssub.s32 %s14, 1
      %s20 = ssub.s32 %s14, 2
      %s27 = sadd.s32 1, %s22
      %p28 = scmp.ge.s32.totalorder %s27, 2
      %s29 = scalar_select %p28, 0, %s27
      %s30 = sadd.s32 1, %s21
      %s31 = scalar_select %p28, %s30, %s21
      %p32 = scmp.ge.s32.totalorder %s31, 2
      %s33 = scalar_select %p32, 0, %s31
      %s34 = ssub.s32 %s21, %s33
      %p35 = scmp.eq.s32.totalorder %s34, 0
      %s37 = sadd.s32 %s36, 1
      %s38 = scalar_select %p35, %s36, %s37
      %p41 = pneg %p35
      %p42 = scmp.eq.s32.totalorder %s14, 3
      %p43 = por %p41, %p42
      %p44 = scmp.ne.s32.totalorder %s36, %s39
      %p45 = scmp.eq.s32.totalorder %s14, 0
      %p46 = por %p44, %p45
      %p47 = scmp.ne.s32.totalorder %s36, %s39
      %p48 = scmp.eq.s32.totalorder %s19, 3
      %p49 = por %p47, %p48
      %p50 = scmp.ne.s32.totalorder %s39, %s40
      %p51 = scmp.eq.s32.totalorder %s19, 0
      %p52 = por %p50, %p51
      %p53 = scmp.ne.s32.totalorder %s39, %s40
      %p54 = scmp.eq.s32.totalorder %s20, 3
      %p55 = por %p53, %p54
      %p57 = scmp.ne.s32.totalorder %s40, %s56
      %p58 = scmp.eq.s32.totalorder %s20, 0
      %p59 = por %p57, %p58
      %s61 = sadd.s32 %s60, 1
      %p64 = scmp.eq.s32.totalorder %s14, 3
      %p65 = scmp.ne.s32.totalorder %s60, %s62
      %p66 = scmp.eq.s32.totalorder %s14, 0
      %p67 = por %p65, %p66
      %p68 = scmp.ne.s32.totalorder %s60, %s62
      %p69 = scmp.eq.s32.totalorder %s19, 3
      %p70 = por %p68, %p69
      %p71 = scmp.ne.s32.totalorder %s62, %s63
      %p72 = scmp.eq.s32.totalorder %s19, 0
      %p73 = por %p71, %p72
      %p74 = scmp.ne.s32.totalorder %s62, %s63
      %p75 = scmp.eq.s32.totalorder %s20, 3
      %p76 = por %p74, %p75
      %p78 = scmp.ne.s32.totalorder %s63, %s77
      %p79 = scmp.eq.s32.totalorder %s20, 0
      %p80 = por %p78, %p79
      %s82 = sadd.s32 %s81, 1
      %p85 = scmp.eq.s32.totalorder %s14, 3
      %p86 = scmp.ne.s32.totalorder %s81, %s83
      %p87 = scmp.eq.s32.totalorder %s14, 0
      %p88 = por %p86, %p87
      %p89 = scmp.ne.s32.totalorder %s81, %s83
      %p90 = scmp.eq.s32.totalorder %s19, 3
      %p91 = por %p89, %p90
      %p92 = scmp.ne.s32.totalorder %s83, %s84
      %p93 = scmp.eq.s32.totalorder %s19, 0
      %p94 = por %p92, %p93
      %p95 = scmp.ne.s32.totalorder %s83, %s84
      %p96 = scmp.eq.s32.totalorder %s20, 3
      %p97 = por %p95, %p96
      %p99 = scmp.ne.s32.totalorder %s84, %s98
      %p100 = scmp.eq.s32.totalorder %s20, 0
      %p101 = por %p99, %p100
      %s103 = sadd.s32 %s102, 1
      %p106 = scmp.eq.s32.totalorder %s14, 3
      %p107 = scmp.ne.s32.totalorder %s102, %s104
      %p108 = scmp.eq.s32.totalorder %s14, 0
      %p109 = por %p107, %p108
      %p110 = scmp.ne.s32.totalorder %s102, %s104
      %p111 = scmp.eq.s32.totalorder %s19, 3
      %p112 = por %p110, %p111
      %p113 = scmp.ne.s32.totalorder %s104, %s105
      %p114 = scmp.eq.s32.totalorder %s19, 0
      %p115 = por %p113, %p114
      %p116 = scmp.ne.s32.totalorder %s104, %s105
      %p117 = scmp.eq.s32.totalorder %s20, 3
      %p118 = por %p116, %p117
      %p120 = scmp.ne.s32.totalorder %s105, %s119
      %p121 = scmp.eq.s32.totalorder %s20, 0
      %p122 = por %p120, %p121
      %s123 = ssub.s32 %s21, %s33
      %s124 = ssub.s32 %s22, %s29
      %s125 = sor.u32 %s123, %s124
      %p126 = scmp.eq.s32.totalorder %s125, 0
      %s128 = sadd.s32 %s127, 1
      %s129 = scalar_select %p126, %s127, %s128
      %p132 = pneg %p126
      %p133 = scmp.eq.s32.totalorder %s14, 3
      %p134 = por %p132, %p133
      %p135 = scmp.ne.s32.totalorder %s127, %s130
      %p136 = scmp.eq.s32.totalorder %s14, 0
      %p137 = por %p135, %p136
      %p138 = scmp.ne.s32.totalorder %s127, %s130
      %p139 = scmp.eq.s32.totalorder %s19, 3
      %p140 = por %p138, %p139
      %p141 = scmp.ne.s32.totalorder %s130, %s131
      %p142 = scmp.eq.s32.totalorder %s19, 0
      %p143 = por %p141, %p142
      %p144 = scmp.ne.s32.totalorder %s130, %s131
      %p145 = scmp.eq.s32.totalorder %s20, 3
      %p146 = por %p144, %p145
      %p148 = scmp.ne.s32.totalorder %s131, %s147
      %p149 = scmp.eq.s32.totalorder %s20, 0
      %p150 = por %p148, %p149
      %p151 = scmp.le.s32.totalorder 1, %s14
      %p152 = scmp.lt.s32.totalorder %s14, 5
      %p153 = pnand %p151, %p152
      %p154 = pneg %p153
      // Predicated region
      $region9: #{tpu_custom_call.1} parent=5 // pred_check
        _
      $region10: #{tpu_custom_call.1} parent=5 // pred_check_branch
        %156 = sbr.rel (%p153) target = $region12
      $region11: #{tpu_custom_call.1} parent=5 // pred_region
        %s157 = ssub.s32 %s14, 1
        // Predicated region
        $region13: #{tpu_custom_call.1} parent=11 // pred_check
          %p158 = pneg %p52
        $region14: #{tpu_custom_call.1} parent=11 // pred_check_branch
          %160 = sbr.rel (%p158) target = $region16
        $region15: #{tpu_custom_call.1} parent=11 // pred_region
          %p161 = scmp.lt.s32.totalorder %s23, 1
          %s162 = scalar_select %p161, %s23, 1
          %s163 = smul.addr %s162, 4
          %s164 = smul.addr %s163, 8
          %s165 = scalar_lea.vmem %s0, %s164
        $region16: #{tpu_custom_call.1} parent=11 // pred_fallthru
          _
        // Predicated region
        $region17: #{tpu_custom_call.1} parent=11 // pred_check
          %p166 = pneg %p73
        $region18: #{tpu_custom_call.1} parent=11 // pred_check_branch
          %168 = sbr.rel (%p166) target = $region20
        $region19: #{tpu_custom_call.1} parent=11 // pred_region
          _
        $region20: #{tpu_custom_call.1} parent=11 // pred_fallthru
          _
        // Predicated region
        $region21: #{tpu_custom_call.1} parent=11 // pred_check
          %p169 = pneg %p94
        $region22: #{tpu_custom_call.1} parent=11 // pred_check_branch
          %171 = sbr.rel (%p169) target = $region24
        $region23: #{tpu_custom_call.1} parent=11 // pred_region
          _
        $region24: #{tpu_custom_call.1} parent=11 // pred_fallthru
          _
        // Predicated region
        $region25: #{tpu_custom_call.1} parent=11 // pred_check
          %p172 = pneg %p115
        $region26: #{tpu_custom_call.1} parent=11 // pred_check_branch
          %174 = sbr.rel (%p172) target = $region28
        $region27: #{tpu_custom_call.1} parent=11 // pred_region
          _
        $region28: #{tpu_custom_call.1} parent=11 // pred_fallthru
          _
      $region12: #{tpu_custom_call.1} parent=5 // pred_fallthru
        _
      %p175 = scmp.lt.s32.totalorder %s14, 4
      // Predicated region
      $region29: #{tpu_custom_call.1} parent=5 // pred_check
        %p176 = pneg %p175
      $region30: #{tpu_custom_call.1} parent=5 // pred_check_branch
        %178 = sbr.rel (%p176) target = $region32
      $region31: #{tpu_custom_call.1} parent=5 // pred_region
        _
      $region32: #{tpu_custom_call.1} parent=5 // pred_fallthru
        _
      %p179 = scmp.le.s32.totalorder 1, %s14
      %p180 = scmp.lt.s32.totalorder %s14, 5
      %p181 = pnand %p179, %p180
      %p182 = pneg %p181
      // Predicated region
      $region33: #{tpu_custom_call.1} parent=5 // pred_check
        _
      $region34: #{tpu_custom_call.1} parent=5 // pred_check_branch
        %184 = sbr.rel (%p181) target = $region36
      $region35: #{tpu_custom_call.1} parent=5 // pred_region
        %s185 = ssub.s32 %s14, 1
        %p186 = scmp.lt.s32.totalorder %s23, 1
        %s187 = scalar_select %p186, %s23, 1
        %s188 = smul.addr %s187, 4
        %s189 = smul.addr %s188, 8
        %s190 = scalar_lea.vmem %s0, %s189
        %p191 = pneg %p52
        %p192 = pneg %p49
        %p193 = pneg %p73
        %p194 = pneg %p70
        %p195 = pneg %p94
        %p196 = pneg %p91
        %p197 = pneg %p115
        %p198 = pneg %p112
        %p199 = pneg %p143
        %p200 = pneg %p140
        %s201 = sand.u32 %s130, 1
        %s202 = scalar_lea.sflag [#allocation7], %s201
        %s203 = sand.u32 %s130, 1
        %s204 = smul.addr %s203, 16
        %s205 = scalar_lea.vmem [#allocation6], %s204
        %p206 = scmp.lt.s32.totalorder %s23, 1
        %s207 = scalar_select %p206, %s23, 1
        %s208 = smul.addr %s207, 4
        %s209 = smul.addr %s208, 8
        %s210 = scalar_lea.vmem %s0, %s209
        %p212 = scmp.eq.s32.totalorder %s24, 0
        // Predicated region
        $region37: #{tpu_custom_call.1} parent=35 // pred_check
          %p213 = pneg %p212
        $region38: #{tpu_custom_call.1} parent=35 // pred_check_branch
          %215 = sbr.rel (%p213) target = $region40
        $region39: #{tpu_custom_call.1} parent=35 // pred_region
          loop: start=0, step=1, limit=2
          $region41: #{tpu_custom_call.1} parent=39 // loop_pre_header
            _
          $region42: #{tpu_custom_call.1} parent=39 // loop_header
            %s217 = sphi 0, %s221
            %p218 = scmp.ge.s32.totalorder %s217, 2
          $region43: #{tpu_custom_call.1} parent=39 // loop_header_branch
            %220 = sbr.rel (%p218) target = $region47
          $region44: #{tpu_custom_call.1} parent=39 // loop_body
            %s222 = smul.u32 %s217, 128
            %s223 = sshra.s32 %s222, 7
            %s224 = sand.u32 %s222, 127
            %s225 = smul.addr %s223, 8
            %s226 = scalar_lea.vmem %s210, %s225
            %v227 = vld [vmem:[%s226] sm:$0xff]
            %v228 = vld [vmem:[%s226 + $0x10] sm:$0xff]
            %v229 = vpack.c.bf16 %v228, %v227
            %v230 = vld [vmem:[%s1] sm:$0xf]
            %v231 = vld [vmem:[%s1 + $0x4] sm:$0xf]
            %v232 = vld [vmem:[%s1 + $0x8] sm:$0xf]
            %v233 = vld [vmem:[%s1 + $0xc] sm:$0xf]
            %v234 = vld [vmem:[%s1 + $0x10] sm:$0xf]
            %v235 = vld [vmem:[%s2] sm:$0xff]
            %v236 = vld [vmem:[%s2 + $0x8] sm:$0xff]
            %v237 = vld [vmem:[%s2 + $0x10] sm:$0xff]
            %v238 = vld [vmem:[%s2 + $0x18] sm:$0xff]
            %v239 = vld [vmem:[%s2 + $0x20] sm:$0xff]
            %241 = vset.pattern.permute.xlu0 0
            %242 = vperm.xlu0 %241, %v235
            %v243 = vpop.permute.xlu0 %242
            %246 = vset.pattern.permute.xlu0 0
            %247 = vperm.xlu0 %246, %v236
            %v248 = vpop.permute.xlu0 %247
            %251 = vset.pattern.permute.xlu0 0
            %252 = vperm.xlu0 %251, %v237
            %v253 = vpop.permute.xlu0 %252
            %256 = vset.pattern.permute.xlu0 0
            %257 = vperm.xlu0 %256, %v238
            %v258 = vpop.permute.xlu0 %257
            %261 = vset.pattern.permute.xlu0 0
            %262 = vperm.xlu0 %261, %v239
            %v263 = vpop.permute.xlu0 %262
            %v270 = vunpack.c.l.b16 %v230
            %v271 = vunpack.c.l.b16 %v231
            %v272 = vunpack.c.l.b16 %v232
            %v273 = vunpack.c.l.b16 %v233
            %v274 = vunpack.c.l.b16 %v234
            %v275 = vpack.c.b16 %v271, %v270
            %v276 = vpack.c.b16 %v273, %v272
            %v277 = vpack.c.b16 %v274, %v274
            %vm278 = vcmask 130048
            %v280 = vsel %vm278, %v275, 0
            %v283 = vsel %vm278, %v276, 0
            %v286 = vsel %vm278, %v277, 0
            %288 = vmatprep.subr.bf16.mxu0 0
            %289 = vmatpush1.bf16.msra.mxu0 0
            %290 = vmatprep.subr.bf16.mxu0 0
            %291 = vmatpush1.bf16.msra.mxu0 0
            %292 = vmatprep.subr.bf16.mxu0 0
            %293 = vmatpush1.bf16.msra.mxu0 0
            %294 = vmatprep.subr.bf16.mxu0 0
            %295 = vmatpush1.bf16.msra.mxu0 0
            %296 = vmatprep.subr.bf16.mxu0 0
            %297 = vmatpush1.bf16.msra.mxu0 0
            %298 = vmatprep.subr.bf16.mxu0 0
            %299 = vmatpush1.bf16.msra.mxu0 0
            %300 = vmatprep.subr.bf16.mxu0 0
            %301 = vmatpush1.bf16.msra.mxu0 0
            %302 = vmatprep.subr.bf16.mxu0 0
            %303 = vmatpush1.bf16.msra.mxu0 %v229
            %304 = vmatprep.subr.bf16.mxu0 0
            %305 = vmatpush2.bf16.msra.mxu0 0
            %306 = vmatprep.subr.bf16.mxu0 0
            %307 = vmatpush2.bf16.msra.mxu0 0
            %308 = vmatprep.subr.bf16.mxu0 0
            %309 = vmatpush2.bf16.msra.mxu0 0
            %310 = vmatprep.subr.bf16.mxu0 0
            %311 = vmatpush2.bf16.msra.mxu0 0
            %312 = vmatprep.subr.bf16.mxu0 0
            %313 = vmatpush2.bf16.msra.mxu0 0
            %314 = vmatprep.subr.bf16.mxu0 0
            %315 = vmatpush2.bf16.msra.mxu0 0
            %316 = vmatprep.subr.bf16.mxu0 0
            %317 = vmatpush2.bf16.msra.mxu0 0
            %318 = vmatprep.subr.bf16.mxu0 0
            %319 = vmatpush2.bf16.msra.mxu0 0
            %320 = vmatprep.mubr.bf16.mxu0 0
            %321 = vmatmul.mubr.bf16.gmra.mxu0 %v280
            %v322 = vpop.f32.mrf.mxu0
            %v323 = vadd.f32 %v243, %v322
            %v324 = vpop.f32.mrf.mxu0
            %v325 = vpop.f32.mrf.mxu0
            %v326 = vadd.f32 %v248, %v325
            %v327 = vpop.f32.mrf.mxu0
            %328 = vmatprep.mubr.bf16.mxu0 0
            %329 = vmatmul.mubr.bf16.gmra.mxu0 %v283
            %v330 = vpop.f32.mrf.mxu0
            %v331 = vadd.f32 %v253, %v330
            %v332 = vpop.f32.mrf.mxu0
            %v333 = vpop.f32.mrf.mxu0
            %v334 = vadd.f32 %v258, %v333
            %v335 = vpop.f32.mrf.mxu0
            %336 = vmatprep.mubr.bf16.mxu0 0
            %337 = vmatmul.mubr.bf16.gmra.mxu0 %v286
            %v338 = vpop.f32.mrf.mxu0
            %v339 = vadd.f32 %v263, %v338
            %v340 = vpop.f32.mrf.mxu0
            %v341 = vpop.f32.mrf.mxu0
            %v342 = vpop.f32.mrf.mxu0
            %343 = vdwg.mxu0
            %v344 = vpack.c.bf16 %v323, %v323
            %s345 = smul.addr %s223, 4
            %s346 = scalar_lea.vmem [#allocation2], %s345
            %347 = vst [vmem:[%s346] sm:$0xf] %v344
            %v348 = vpack.c.bf16 %v326, %v326
            %s349 = smul.addr %s223, 4
            %s350 = scalar_lea.vmem [#allocation3], %s349
            %351 = vst [vmem:[%s350] sm:$0xf] %v348
            %v352 = vpack.c.bf16 %v334, %v331
            %v353 = vpack.c.bf16 %v339, %v339
            %v356 = vunpack.c.l.b16 %v352
            %v357 = vunpack.c.h.b16 %v352
            %v358 = vunpack.c.l.b16 %v353
            %v359 = vpack.c.b16 %v356, %v356
            %v360 = vpack.c.b16 %v357, %v357
            %v361 = vpack.c.b16 %v358, %v358
            %s365 = smul.addr %s223, 4
            %s366 = scalar_lea.vmem [#allocation4], %s365
            %367 = vst [vmem:[%s366] sm:$0xf] %v359
            %368 = vst [vmem:[%s366 + $0x8] sm:$0xf] %v360
            %369 = vst [vmem:[%s366 + $0x10] sm:$0xf] %v361
          $region45: #{tpu_custom_call.1} parent=39 // loop_footer
            %s221 = sadd.s32 1, %s217
          $region46: #{tpu_custom_call.1} parent=39 // loop_footer_branch
            %216 = sbr.rel target = $region42
          $region47: #{tpu_custom_call.1} parent=39 // loop_exit
            _
        $region40: #{tpu_custom_call.1} parent=35 // pred_fallthru
          _
        %s370 = smul.u32 %s24, 128
        %s371 = sshra.s32 %s370, 7
        %s372 = sand.u32 %s370, 127
        %s373 = smul.addr %s371, 4
        %s374 = scalar_lea.vmem [#allocation2], %s373
        %v375 = vld [vmem:[%s374] sm:$0xf]
        %v376 = vld [vmem:[#allocation3] sm:$0xff]
        %377 = vxpose.xlu0.c.b16.start [1/8] %v375, 128
        %378 = vxpose.xlu0.c.b16.cont [2/8] 0, 128
        %379 = vxpose.xlu0.c.b16.cont [3/8] 0, 128
        %380 = vxpose.xlu0.c.b16.cont [4/8] 0, 128
        %381 = vxpose.xlu0.c.b16.cont [5/8] 0, 128
        %382 = vxpose.xlu0.c.b16.cont [6/8] 0, 128
        %383 = vxpose.xlu0.c.b16.cont [7/8] 0, 128
        %384 = vxpose.xlu0.c.b16.end [8/8] 0, 128
        %v385 = vpop.trf.xlu0
        %v386 = vpop.trf.xlu0
        %v387 = vpop.trf.xlu0
        %v388 = vpop.trf.xlu0
        %v389 = vpop.trf.xlu0
        %v390 = vpop.trf.xlu0
        %v391 = vpop.trf.xlu0
        %v392 = vpop.trf.xlu0
        %v394 = vunpack.c.l.b16 %v376
        %v395 = vunpack.c.h.b16 %v376
        %v396 = vpack.c.b16 %v394, %v394
        %v397 = vpack.c.b16 %v395, %v395
        %vm398 = vcmask 64512
        %v400 = vsel %vm398, %v385, 0
        %v403 = vsel %vm398, %v386, 0
        %v406 = vsel %vm398, %v387, 0
        %v409 = vsel %vm398, %v388, 0
        %v412 = vsel %vm398, %v389, 0
        %v415 = vsel %vm398, %v390, 0
        %v418 = vsel %vm398, %v391, 0
        %v421 = vsel %vm398, %v392, 0
        %vm423 = vcmask 1043456
        %v425 = vsel %vm423, %v396, 0
        %v428 = vsel %vm423, %v397, 0
        %430 = vmatprep.subr.bf16.mxu0 0
        %431 = vmatpush1.bf16.msra.mxu0 0
        %432 = vmatprep.subr.bf16.mxu0 0
        %433 = vmatpush1.bf16.msra.mxu0 0
        %434 = vmatprep.subr.bf16.mxu0 0
        %435 = vmatpush1.bf16.msra.mxu0 0
        %436 = vmatprep.subr.bf16.mxu0 0
        %437 = vmatpush1.bf16.msra.mxu0 0
        %438 = vmatprep.subr.bf16.mxu0 0
        %439 = vmatpush1.bf16.msra.mxu0 0
        %440 = vmatprep.subr.bf16.mxu0 0
        %441 = vmatpush1.bf16.msra.mxu0 0
        %442 = vmatprep.subr.bf16.mxu0 0
        %443 = vmatpush1.bf16.msra.mxu0 0
        %444 = vmatprep.subr.bf16.mxu0 %v428
        %445 = vmatpush1.bf16.msra.mxu0 %v425
        %446 = vmatprep.subr.bf16.mxu0 0
        %447 = vmatpush2.bf16.msra.mxu0 0
        %448 = vmatprep.subr.bf16.mxu0 0
        %449 = vmatpush2.bf16.msra.mxu0 0
        %450 = vmatprep.subr.bf16.mxu0 0
        %451 = vmatpush2.bf16.msra.mxu0 0
        %452 = vmatprep.subr.bf16.mxu0 0
        %453 = vmatpush2.bf16.msra.mxu0 0
        %454 = vmatprep.subr.bf16.mxu0 0
        %455 = vmatpush2.bf16.msra.mxu0 0
        %456 = vmatprep.subr.bf16.mxu0 0
        %457 = vmatpush2.bf16.msra.mxu0 0
        %458 = vmatprep.subr.bf16.mxu0 0
        %459 = vmatpush2.bf16.msra.mxu0 0
        %460 = vmatprep.subr.bf16.mxu0 0
        %461 = vmatpush2.bf16.msra.mxu0 0
        %462 = vmatprep.mubr.bf16.mxu0 0
        %463 = vmatmul.mubr.bf16.gmra.mxu0 %v400
        %v464 = vpop.f32.mrf.mxu0
        %v465 = vadd.f32 0.0, %v464
        %v466 = vpop.f32.mrf.mxu0
        %v467 = vadd.f32 0.0, %v466
        %v468 = vpop.f32.mrf.mxu0
        %v469 = vadd.f32 0.0, %v468
        %v470 = vpop.f32.mrf.mxu0
        %v471 = vadd.f32 0.0, %v470
        %472 = vmatprep.mubr.bf16.mxu0 0
        %473 = vmatmul.mubr.bf16.gmra.mxu0 %v403
        %v474 = vpop.f32.mrf.mxu0
        %v475 = vadd.f32 0.0, %v474
        %v476 = vpop.f32.mrf.mxu0
        %v477 = vadd.f32 0.0, %v476
        %v478 = vpop.f32.mrf.mxu0
        %v479 = vadd.f32 0.0, %v478
        %v480 = vpop.f32.mrf.mxu0
        %v481 = vadd.f32 0.0, %v480
        %482 = vmatprep.mubr.bf16.mxu0 0
        %483 = vmatmul.mubr.bf16.gmra.mxu0 %v406
        %v484 = vpop.f32.mrf.mxu0
        %v485 = vadd.f32 0.0, %v484
        %v486 = vpop.f32.mrf.mxu0
        %v487 = vadd.f32 0.0, %v486
        %v488 = vpop.f32.mrf.mxu0
        %v489 = vadd.f32 0.0, %v488
        %v490 = vpop.f32.mrf.mxu0
        %v491 = vadd.f32 0.0, %v490
        %492 = vmatprep.mubr.bf16.mxu0 0
        %493 = vmatmul.mubr.bf16.gmra.mxu0 %v409
        %v494 = vpop.f32.mrf.mxu0
        %v495 = vadd.f32 0.0, %v494
        %v496 = vpop.f32.mrf.mxu0
        %v497 = vadd.f32 0.0, %v496
        %v498 = vpop.f32.mrf.mxu0
        %v499 = vadd.f32 0.0, %v498
        %v500 = vpop.f32.mrf.mxu0
        %v501 = vadd.f32 0.0, %v500
        %502 = vmatprep.mubr.bf16.mxu0 0
        %503 = vmatmul.mubr.bf16.gmra.mxu0 %v412
        %v504 = vpop.f32.mrf.mxu0
        %v505 = vadd.f32 0.0, %v504
        %v506 = vpop.f32.mrf.mxu0
        %v507 = vadd.f32 0.0, %v506
        %v508 = vpop.f32.mrf.mxu0
        %v509 = vadd.f32 0.0, %v508
        %v510 = vpop.f32.mrf.mxu0
        %v511 = vadd.f32 0.0, %v510
        %512 = vmatprep.mubr.bf16.mxu0 0
        %513 = vmatmul.mubr.bf16.gmra.mxu0 %v415
        %v514 = vpop.f32.mrf.mxu0
        %v515 = vadd.f32 0.0, %v514
        %v516 = vpop.f32.mrf.mxu0
        %v517 = vadd.f32 0.0, %v516
        %v518 = vpop.f32.mrf.mxu0
        %v519 = vadd.f32 0.0, %v518
        %v520 = vpop.f32.mrf.mxu0
        %v521 = vadd.f32 0.0, %v520
        %522 = vmatprep.mubr.bf16.mxu0 0
        %523 = vmatmul.mubr.bf16.gmra.mxu0 %v418
        %v524 = vpop.f32.mrf.mxu0
        %v525 = vadd.f32 0.0, %v524
        %v526 = vpop.f32.mrf.mxu0
        %v527 = vadd.f32 0.0, %v526
        %v528 = vpop.f32.mrf.mxu0
        %v529 = vadd.f32 0.0, %v528
        %v530 = vpop.f32.mrf.mxu0
        %v531 = vadd.f32 0.0, %v530
        %532 = vmatprep.mubr.bf16.mxu0 0
        %533 = vmatmul.mubr.bf16.gmra.mxu0 %v421
        %v534 = vpop.f32.mrf.mxu0
        %v535 = vadd.f32 0.0, %v534
        %v536 = vpop.f32.mrf.mxu0
        %v537 = vadd.f32 0.0, %v536
        %v538 = vpop.f32.mrf.mxu0
        %v539 = vadd.f32 0.0, %v538
        %v540 = vpop.f32.mrf.mxu0
        %v541 = vadd.f32 0.0, %v540
        %542 = vdwg.mxu0
        %v543 = vmax.f32 %v465, %v467
        %544 = vmax.xlane.f32.xlu0 %v543
        %v545 = vpop.xlane.xlu0 %544
        %v546 = vmax.f32 %v469, %v471
        %547 = vmax.xlane.f32.xlu0 %v546
        %v548 = vpop.xlane.xlu0 %547
        %v549 = vmax.f32 %v475, %v477
        %550 = vmax.xlane.f32.xlu0 %v549
        %v551 = vpop.xlane.xlu0 %550
        %v552 = vmax.f32 %v479, %v481
        %553 = vmax.xlane.f32.xlu0 %v552
        %v554 = vpop.xlane.xlu0 %553
        %v555 = vmax.f32 %v485, %v487
        %556 = vmax.xlane.f32.xlu0 %v555
        %v557 = vpop.xlane.xlu0 %556
        %v558 = vmax.f32 %v489, %v491
        %559 = vmax.xlane.f32.xlu0 %v558
        %v560 = vpop.xlane.xlu0 %559
        %v561 = vmax.f32 %v495, %v497
        %562 = vmax.xlane.f32.xlu0 %v561
        %v563 = vpop.xlane.xlu0 %562
        %v564 = vmax.f32 %v499, %v501
        %565 = vmax.xlane.f32.xlu0 %v564
        %v566 = vpop.xlane.xlu0 %565
        %v567 = vmax.f32 %v505, %v507
        %568 = vmax.xlane.f32.xlu0 %v567
        %v569 = vpop.xlane.xlu0 %568
        %v570 = vmax.f32 %v509, %v511
        %571 = vmax.xlane.f32.xlu0 %v570
        %v572 = vpop.xlane.xlu0 %571
        %v573 = vmax.f32 %v515, %v517
        %574 = vmax.xlane.f32.xlu0 %v573
        %v575 = vpop.xlane.xlu0 %574
        %v576 = vmax.f32 %v519, %v521
        %577 = vmax.xlane.f32.xlu0 %v576
        %v578 = vpop.xlane.xlu0 %577
        %v579 = vmax.f32 %v525, %v527
        %580 = vmax.xlane.f32.xlu0 %v579
        %v581 = vpop.xlane.xlu0 %580
        %v582 = vmax.f32 %v529, %v531
        %583 = vmax.xlane.f32.xlu0 %v582
        %v584 = vpop.xlane.xlu0 %583
        %v585 = vmax.f32 %v535, %v537
        %586 = vmax.xlane.f32.xlu0 %v585
        %v587 = vpop.xlane.xlu0 %586
        %v588 = vmax.f32 %v539, %v541
        %589 = vmax.xlane.f32.xlu0 %v588
        %v590 = vpop.xlane.xlu0 %589
        %v591 = vsub.f32 %v465, %v545
        %v592 = vsub.f32 %v467, %v545
        %v593 = vsub.f32 %v469, %v548
        %v594 = vsub.f32 %v471, %v548
        %v595 = vsub.f32 %v475, %v551
        %v596 = vsub.f32 %v477, %v551
        %v597 = vsub.f32 %v479, %v554
        %v598 = vsub.f32 %v481, %v554
        %v599 = vsub.f32 %v485, %v557
        %v600 = vsub.f32 %v487, %v557
        %v601 = vsub.f32 %v489, %v560
        %v602 = vsub.f32 %v491, %v560
        %v603 = vsub.f32 %v495, %v563
        %v604 = vsub.f32 %v497, %v563
        %v605 = vsub.f32 %v499, %v566
        %v606 = vsub.f32 %v501, %v566
        %v607 = vsub.f32 %v505, %v569
        %v608 = vsub.f32 %v507, %v569
        %v609 = vsub.f32 %v509, %v572
        %v610 = vsub.f32 %v511, %v572
        %v611 = vsub.f32 %v515, %v575
        %v612 = vsub.f32 %v517, %v575
        %v613 = vsub.f32 %v519, %v578
        %v614 = vsub.f32 %v521, %v578
        %v615 = vsub.f32 %v525, %v581
        %v616 = vsub.f32 %v527, %v581
        %v617 = vsub.f32 %v529, %v584
        %v618 = vsub.f32 %v531, %v584
        %v619 = vsub.f32 %v535, %v587
        %v620 = vsub.f32 %v537, %v587
        %v621 = vsub.f32 %v539, %v590
        %v622 = vsub.f32 %v541, %v590
        %v623 = vmul.f32 %v591, 1.442695
        %v624 = vpow.pop %v623
        %v625 = vmul.f32 %v592, 1.442695
        %v626 = vpow.pop %v625
        %v627 = vmul.f32 %v593, 1.442695
        %v628 = vpow.pop %v627
        %v629 = vmul.f32 %v594, 1.442695
        %v630 = vpow.pop %v629
        %v631 = vmul.f32 %v595, 1.442695
        %v632 = vpow.pop %v631
        %v633 = vmul.f32 %v596, 1.442695
        %v634 = vpow.pop %v633
        %v635 = vmul.f32 %v597, 1.442695
        %v636 = vpow.pop %v635
        %v637 = vmul.f32 %v598, 1.442695
        %v638 = vpow.pop %v637
        %v639 = vmul.f32 %v599, 1.442695
        %v640 = vpow.pop %v639
        %v641 = vmul.f32 %v600, 1.442695
        %v642 = vpow.pop %v641
        %v643 = vmul.f32 %v601, 1.442695
        %v644 = vpow.pop %v643
        %v645 = vmul.f32 %v602, 1.442695
        %v646 = vpow.pop %v645
        %v647 = vmul.f32 %v603, 1.442695
        %v648 = vpow.pop %v647
        %v649 = vmul.f32 %v604, 1.442695
        %v650 = vpow.pop %v649
        %v651 = vmul.f32 %v605, 1.442695
        %v652 = vpow.pop %v651
        %v653 = vmul.f32 %v606, 1.442695
        %v654 = vpow.pop %v653
        %v655 = vmul.f32 %v607, 1.442695
        %v656 = vpow.pop %v655
        %v657 = vmul.f32 %v608, 1.442695
        %v658 = vpow.pop %v657
        %v659 = vmul.f32 %v609, 1.442695
        %v660 = vpow.pop %v659
        %v661 = vmul.f32 %v610, 1.442695
        %v662 = vpow.pop %v661
        %v663 = vmul.f32 %v611, 1.442695
        %v664 = vpow.pop %v663
        %v665 = vmul.f32 %v612, 1.442695
        %v666 = vpow.pop %v665
        %v667 = vmul.f32 %v613, 1.442695
        %v668 = vpow.pop %v667
        %v669 = vmul.f32 %v614, 1.442695
        %v670 = vpow.pop %v669
        %v671 = vmul.f32 %v615, 1.442695
        %v672 = vpow.pop %v671
        %v673 = vmul.f32 %v616, 1.442695
        %v674 = vpow.pop %v673
        %v675 = vmul.f32 %v617, 1.442695
        %v676 = vpow.pop %v675
        %v677 = vmul.f32 %v618, 1.442695
        %v678 = vpow.pop %v677
        %v679 = vmul.f32 %v619, 1.442695
        %v680 = vpow.pop %v679
        %v681 = vmul.f32 %v620, 1.442695
        %v682 = vpow.pop %v681
        %v683 = vmul.f32 %v621, 1.442695
        %v684 = vpow.pop %v683
        %v685 = vmul.f32 %v622, 1.442695
        %v686 = vpow.pop %v685
        %v687 = vpack.c.bf16 %v628, %v624
        %v688 = vpack.c.bf16 %v630, %v626
        %v689 = vpack.c.bf16 %v636, %v632
        %v690 = vpack.c.bf16 %v638, %v634
        %v691 = vpack.c.bf16 %v644, %v640
        %v692 = vpack.c.bf16 %v646, %v642
        %v693 = vpack.c.bf16 %v652, %v648
        %v694 = vpack.c.bf16 %v654, %v650
        %v695 = vpack.c.bf16 %v660, %v656
        %v696 = vpack.c.bf16 %v662, %v658
        %v697 = vpack.c.bf16 %v668, %v664
        %v698 = vpack.c.bf16 %v670, %v666
        %v699 = vpack.c.bf16 %v676, %v672
        %v700 = vpack.c.bf16 %v678, %v674
        %v701 = vpack.c.bf16 %v684, %v680
        %v702 = vpack.c.bf16 %v686, %v682
        %v703 = vld [vmem:[#allocation4] sm:$0xff]
        %v704 = vld [vmem:[#allocation4 + $0x8] sm:$0xff]
        %v705 = vld [vmem:[#allocation4 + $0x10] sm:$0xff]
        %v709 = vunpack.c.l.b16 %v703
        %v710 = vunpack.c.h.b16 %v703
        %v711 = vunpack.c.l.b16 %v704
        %v712 = vunpack.c.h.b16 %v704
        %v713 = vunpack.c.l.b16 %v705
        %v714 = vunpack.c.h.b16 %v705
        %v715 = vpack.c.b16 %v711, %v709
        %v716 = vpack.c.b16 %v712, %v710
        %v717 = vpack.c.b16 %v713, %v713
        %v718 = vpack.c.b16 %v714, %v714
        %723 = vmatprep.subr.bf16.mxu0 %v702
        %724 = vmatpush1.bf16.xpose.msra.mxu0 %v701
        %725 = vmatprep.subr.bf16.mxu0 %v700
        %726 = vmatpush1.bf16.xpose.msra.mxu0 %v699
        %727 = vmatprep.subr.bf16.mxu0 %v698
        %728 = vmatpush1.bf16.xpose.msra.mxu0 %v697
        %729 = vmatprep.subr.bf16.mxu0 %v696
        %730 = vmatpush1.bf16.xpose.msra.mxu0 %v695
        %731 = vmatprep.subr.bf16.mxu0 %v694
        %732 = vmatpush1.bf16.xpose.msra.mxu0 %v693
        %733 = vmatprep.subr.bf16.mxu0 %v692
        %734 = vmatpush1.bf16.xpose.msra.mxu0 %v691
        %735 = vmatprep.subr.bf16.mxu0 %v690
        %736 = vmatpush1.bf16.xpose.msra.mxu0 %v689
        %737 = vmatprep.subr.bf16.mxu0 %v688
        %738 = vmatpush1.bf16.xpose.msra.mxu0 %v687
        %739 = vmatprep.subr.bf16.mxu0 0
        %740 = vmatpush2.bf16.xpose.msra.mxu0 0
        %741 = vmatprep.subr.bf16.mxu0 0
        %742 = vmatpush2.bf16.xpose.msra.mxu0 0
        %743 = vmatprep.subr.bf16.mxu0 0
        %744 = vmatpush2.bf16.xpose.msra.mxu0 0
        %745 = vmatprep.subr.bf16.mxu0 0
        %746 = vmatpush2.bf16.xpose.msra.mxu0 0
        %747 = vmatprep.subr.bf16.mxu0 0
        %748 = vmatpush2.bf16.xpose.msra.mxu0 0
        %749 = vmatprep.subr.bf16.mxu0 0
        %750 = vmatpush2.bf16.xpose.msra.mxu0 0
        %751 = vmatprep.subr.bf16.mxu0 0
        %752 = vmatpush2.bf16.xpose.msra.mxu0 0
        %753 = vmatprep.subr.bf16.mxu0 0
        %754 = vmatpush2.bf16.xpose.msra.mxu0 0
        %755 = vmatprep.mubr.bf16.mxu0 %v716
        %756 = vmatmul.mubr.bf16.gmra.mxu0 %v715
        %v757 = vpop.f32.mrf.mxu0
        %v758 = vadd.f32 0.0, %v757
        %v759 = vpop.f32.mrf.mxu0
        %v760 = vpop.f32.mrf.mxu0
        %v761 = vadd.f32 0.0, %v760
        %v762 = vpop.f32.mrf.mxu0
        %763 = vmatprep.mubr.bf16.mxu0 %v718
        %764 = vmatmul.mubr.bf16.gmra.mxu0 %v717
        %v765 = vpop.f32.mrf.mxu0
        %v766 = vadd.f32 0.0, %v765
        %v767 = vpop.f32.mrf.mxu0
        %v768 = vpop.f32.mrf.mxu0
        %v769 = vpop.f32.mrf.mxu0
        %770 = vdwg.mxu0
        %s771 = sld [smem:[#allocation5]]
        %v772 = vrcp.pop %v766
        %v773 = vstv %s771
        %v774 = vmul.f32 %v773, %v772
        %s775 = smul.addr %s371, 8
        %s776 = scalar_lea.vmem %s210, %s775
        %v777 = vld [vmem:[%s776] sm:$0xff]
        %v778 = vld [vmem:[%s776 + $0x10] sm:$0xff]
        %v779 = vlaneseq
        %v780 = vshrl.u32 %v779, 7
        %v781 = vsub.s32 0, %v780
        %v782 = vrot.slane %v774, %v781
        %v783 = vmul.f32 %v758, %v782
        %v784 = vmul.f32 %v761, %v782
        %v785 = vadd.f32 %v783, %v777
        %v786 = vadd.f32 %v784, %v778
        %787 = vst [vmem:[%s205] sm:$0xff] %v785
        %788 = vst [vmem:[%s205 + $0x8] sm:$0xff] %v786
        %s789 = sand.u32 %s130, 1
        %s790 = scalar_lea.sflag [#allocation7], %s789
        %s791 = sand.u32 %s130, 1
        %s792 = smul.addr %s791, 16
        %s793 = scalar_lea.vmem [#allocation6], %s792
        // Predicated region
        $region48: #{tpu_custom_call.1} parent=35 // pred_check
          %p794 = pneg %p140
        $region49: #{tpu_custom_call.1} parent=35 // pred_check_branch
          %796 = sbr.rel (%p794) target = $region51
        $region50: #{tpu_custom_call.1} parent=35 // pred_region
          %s798 = ssub.s32 256, 256
          %799 = vsyncadd %s790, %s798
          %s800 = smul.addr %s23, 4
          %s801 = sadd.s32 %s24, %s800
          %s802 = smul.addr %s801, 128
          %s803 = scalar_lea.hbm %s4, %s802
          %s804 = sshll.u32 %s793, 4
          %s805 = int_to_ptr.vmem [resolvable:$true] %s804
          %810 = dma.vmem_to_hbm [thread:$0]  %s805, 256, %s803, %s790, 128, 256, 8
        $region51: #{tpu_custom_call.1} parent=35 // pred_fallthru
          _
      $region36: #{tpu_custom_call.1} parent=5 // pred_fallthru
        _
      %p811 = scmp.le.s32.totalorder 2, %s14
      // Predicated region
      $region52: #{tpu_custom_call.1} parent=5 // pred_check
        %p812 = pneg %p811
      $region53: #{tpu_custom_call.1} parent=5 // pred_check_branch
        %814 = sbr.rel (%p812) target = $region55
      $region54: #{tpu_custom_call.1} parent=5 // pred_region
        %s815 = ssub.s32 %s14, 2
        // Predicated region
        $region56: #{tpu_custom_call.1} parent=54 // pred_check
          %p816 = pneg %p146
        $region57: #{tpu_custom_call.1} parent=54 // pred_check_branch
          %818 = sbr.rel (%p816) target = $region59
        $region58: #{tpu_custom_call.1} parent=54 // pred_region
          %s819 = sand.u32 %s131, 1
          %s820 = scalar_lea.sflag [#allocation7], %s819
          %s821 = sand.u32 %s131, 1
          %s822 = smul.addr %s821, 16
          %s823 = scalar_lea.vmem [#allocation6], %s822
          %824 = dma.done %s820, 256
        $region59: #{tpu_custom_call.1} parent=54 // pred_fallthru
          _
      $region55: #{tpu_custom_call.1} parent=5 // pred_fallthru
        _
    $region6: #{tpu_custom_call.1} parent=1 // loop_footer
      %s18 = sadd.s32 1, %s14
    $region7: #{tpu_custom_call.1} parent=1 // loop_footer_branch
      %13 = sbr.rel target = $region3
    $region8: #{tpu_custom_call.1} parent=1 // loop_exit
      _
    %825 = vsyncpa [#allocation7], 1
    %s826 = scalar_lea.sflag [#allocation7], 1
    %827 = vsyncpa %s826, 1

// kernel: tpu_custom_call.1
$region0: #{tpu_custom_call.1}
  #allocation0 [shape = 'u32[]', space=smem, size = 0x4, offset = 0x4, fixed_abs, tag = 'smem constant byte address 0x4 - core index']
  #allocation1 [shape = 'u32[144,128]{1,0:T(1,128)}', space=vmem, size = 0x12000, scoped, tag = 'internal scratch']
  #allocation2 [shape = 'bf16[8,256]{1,0:T(8,128)(2,1)}', space=vmem, size = 0x1000, scoped, tag = 'scratch operand']
  #allocation3 [shape = 'bf16[8,256]{1,0:T(8,128)(2,1)}', space=vmem, size = 0x1000, scoped, tag = 'scratch operand']
  #allocation4 [shape = 'bf16[24,256]{1,0:T(8,128)(2,1)}', space=vmem, size = 0x3000, scoped, tag = 'scratch operand']
  #allocation5 [shape = 'f32[1,1]{1,0:T(1,128)S(6)}', space=smem, size = 0x200, scoped, tag = 'scoped memory for tpu_custom_call.1']
  %s0 = inlined_call_operand.vmem [shape: f32[2,16,256], index: 0, kind: input, shape index: {}]
  %s1 = inlined_call_operand.vmem [shape: bf16[40,16], index: 1, kind: input, shape index: {}]
  %s2 = inlined_call_operand.vmem [shape: f32[40,1], index: 2, kind: input, shape index: {}]
  %s3 = inlined_call_operand.<no memory space> [shape: f32[1,1], index: 3, kind: input, shape index: {}]
  %s4 = inlined_call_operand.hbm [shape: f32[2,16,256], index: 4, kind: output, shape index: {}]
  %s5 = sld [smem:[#allocation0]]
  $region60: #{tpu_custom_call.1} parent=0
    _
  %s7 = ssub.s32 1, %s5
  %s8 = scalar_select 0, %s7, %s5
  %9 = sst [smem:[#allocation5]] %s3
  $region1: #{tpu_custom_call.1} parent=0
    #allocation6 [shape = 'u8[16384]{0}', space=vmem, size = 0x4000, scoped, tag = 'output window, operand 0']
    #allocation7 [shape = 's32[2]{0}', space=sflag, size = 0x8, scoped, tag = 'scoped memory for tpu_custom_call.1']
    %10 = vsyncpa [#allocation7], 0
    %s11 = scalar_lea.sflag [#allocation7], 1
    %12 = vsyncpa %s11, 0
    loop: start=0, step=1, limit=6
    $region2: #{tpu_custom_call.1} parent=1 // loop_pre_header
      _
    $region3: #{tpu_custom_call.1} parent=1 // loop_header
      %s14 = sphi 0, %s18
      %p15 = scmp.ge.s32.totalorder %s14, 6
      %s21 = sphi 0, %s33
      %s22 = sphi 0, %s29
      %s23 = sphi 0, %s21
      %s24 = sphi 0, %s22
      %s25 = sphi 0, %s23
      %s26 = sphi 0, %s24
      %s36 = sphi 0, %s38
      %s39 = sphi 0, %s36
      %s40 = sphi 0, %s39
      %s56 = sphi 0, %s40
      %s60 = sphi 0, %s60
      %s62 = sphi 0, %s60
      %s63 = sphi 0, %s62
      %s77 = sphi 0, %s63
      %s81 = sphi 0, %s81
      %s83 = sphi 0, %s81
      %s84 = sphi 0, %s83
      %s98 = sphi 0, %s84
      %s102 = sphi 0, %s102
      %s104 = sphi 0, %s102
      %s105 = sphi 0, %s104
      %s119 = sphi 0, %s105
      %s127 = sphi 0, %s129
      %s130 = sphi 0, %s127
      %s131 = sphi 0, %s130
      %s147 = sphi 0, %s131
    $region4: #{tpu_custom_call.1} parent=1 // loop_header_branch
      %17 = sbr.rel (%p15) target = $region8
    $region5: #{tpu_custom_call.1} parent=1 // loop_body
      %s19 = ssub.s32 %s14, 1
      %s20 = ssub.s32 %s14, 2
      %s27 = sadd.s32 1, %s22
      %p28 = scmp.ge.s32.totalorder %s27, 2
      %s29 = scalar_select %p28, 0, %s27
      %s30 = sadd.s32 1, %s21
      %s31 = scalar_select %p28, %s30, %s21
      %p32 = scmp.ge.s32.totalorder %s31, 2
      %s33 = scalar_select %p32, 0, %s31
      %s34 = ssub.s32 %s21, %s33
      %p35 = scmp.eq.s32.totalorder %s34, 0
      %s37 = sadd.s32 %s36, 1
      %s38 = scalar_select %p35, %s36, %s37
      %p41 = pneg %p35
      %p42 = scmp.eq.s32.totalorder %s14, 3
      %p43 = por %p41, %p42
      %p44 = scmp.ne.s32.totalorder %s36, %s39
      %p45 = scmp.eq.s32.totalorder %s14, 0
      %p46 = por %p44, %p45
      %p47 = scmp.ne.s32.totalorder %s36, %s39
      %p48 = scmp.eq.s32.totalorder %s19, 3
      %p49 = por %p47, %p48
      %p50 = scmp.ne.s32.totalorder %s39, %s40
      %p51 = scmp.eq.s32.totalorder %s19, 0
      %p52 = por %p50, %p51
      %p53 = scmp.ne.s32.totalorder %s39, %s40
      %p54 = scmp.eq.s32.totalorder %s20, 3
      %p55 = por %p53, %p54
      %p57 = scmp.ne.s32.totalorder %s40, %s56
      %p58 = scmp.eq.s32.totalorder %s20, 0
      %p59 = por %p57, %p58
      %s61 = sadd.s32 %s60, 1
      %p64 = scmp.eq.s32.totalorder %s14, 3
      %p65 = scmp.ne.s32.totalorder %s60, %s62
      %p66 = scmp.eq.s32.totalorder %s14, 0
      %p67 = por %p65, %p66
      %p68 = scmp.ne.s32.totalorder %s60, %s62
      %p69 = scmp.eq.s32.totalorder %s19, 3
      %p70 = por %p68, %p69
      %p71 = scmp.ne.s32.totalorder %s62, %s63
      %p72 = scmp.eq.s32.totalorder %s19, 0
      %p73 = por %p71, %p72
      %p74 = scmp.ne.s32.totalorder %s62, %s63
      %p75 = scmp.eq.s32.totalorder %s20, 3
      %p76 = por %p74, %p75
      %p78 = scmp.ne.s32.totalorder %s63, %s77
      %p79 = scmp.eq.s32.totalorder %s20, 0
      %p80 = por %p78, %p79
      %s82 = sadd.s32 %s81, 1
      %p85 = scmp.eq.s32.totalorder %s14, 3
      %p86 = scmp.ne.s32.totalorder %s81, %s83
      %p87 = scmp.eq.s32.totalorder %s14, 0
      %p88 = por %p86, %p87
      %p89 = scmp.ne.s32.totalorder %s81, %s83
      %p90 = scmp.eq.s32.totalorder %s19, 3
      %p91 = por %p89, %p90
      %p92 = scmp.ne.s32.totalorder %s83, %s84
      %p93 = scmp.eq.s32.totalorder %s19, 0
      %p94 = por %p92, %p93
      %p95 = scmp.ne.s32.totalorder %s83, %s84
      %p96 = scmp.eq.s32.totalorder %s20, 3
      %p97 = por %p95, %p96
      %p99 = scmp.ne.s32.totalorder %s84, %s98
      %p100 = scmp.eq.s32.totalorder %s20, 0
      %p101 = por %p99, %p100
      %s103 = sadd.s32 %s102, 1
      %p106 = scmp.eq.s32.totalorder %s14, 3
      %p107 = scmp.ne.s32.totalorder %s102, %s104
      %p108 = scmp.eq.s32.totalorder %s14, 0
      %p109 = por %p107, %p108
      %p110 = scmp.ne.s32.totalorder %s102, %s104
      %p111 = scmp.eq.s32.totalorder %s19, 3
      %p112 = por %p110, %p111
      %p113 = scmp.ne.s32.totalorder %s104, %s105
      %p114 = scmp.eq.s32.totalorder %s19, 0
      %p115 = por %p113, %p114
      %p116 = scmp.ne.s32.totalorder %s104, %s105
      %p117 = scmp.eq.s32.totalorder %s20, 3
      %p118 = por %p116, %p117
      %p120 = scmp.ne.s32.totalorder %s105, %s119
      %p121 = scmp.eq.s32.totalorder %s20, 0
      %p122 = por %p120, %p121
      %s123 = ssub.s32 %s21, %s33
      %s124 = ssub.s32 %s22, %s29
      %s125 = sor.u32 %s123, %s124
      %p126 = scmp.eq.s32.totalorder %s125, 0
      %s128 = sadd.s32 %s127, 1
      %s129 = scalar_select %p126, %s127, %s128
      %p132 = pneg %p126
      %p133 = scmp.eq.s32.totalorder %s14, 3
      %p134 = por %p132, %p133
      %p135 = scmp.ne.s32.totalorder %s127, %s130
      %p136 = scmp.eq.s32.totalorder %s14, 0
      %p137 = por %p135, %p136
      %p138 = scmp.ne.s32.totalorder %s127, %s130
      %p139 = scmp.eq.s32.totalorder %s19, 3
      %p140 = por %p138, %p139
      %p141 = scmp.ne.s32.totalorder %s130, %s131
      %p142 = scmp.eq.s32.totalorder %s19, 0
      %p143 = por %p141, %p142
      %p144 = scmp.ne.s32.totalorder %s130, %s131
      %p145 = scmp.eq.s32.totalorder %s20, 3
      %p146 = por %p144, %p145
      %p148 = scmp.ne.s32.totalorder %s131, %s147
      %p149 = scmp.eq.s32.totalorder %s20, 0
      %p150 = por %p148, %p149
      %p151 = scmp.le.s32.totalorder 1, %s14
      %p152 = scmp.lt.s32.totalorder %s14, 5
      %p153 = pnand %p151, %p152
      %p154 = pneg %p153
      // Predicated region
      $region9: #{tpu_custom_call.1} parent=5 // pred_check
        _
      $region10: #{tpu_custom_call.1} parent=5 // pred_check_branch
        %156 = sbr.rel (%p153) target = $region12
      $region11: #{tpu_custom_call.1} parent=5 // pred_region
        %s157 = ssub.s32 %s14, 1
        // Predicated region
        $region13: #{tpu_custom_call.1} parent=11 // pred_check
          %p158 = pneg %p73
        $region14: #{tpu_custom_call.1} parent=11 // pred_check_branch
          %160 = sbr.rel (%p158) target = $region16
        $region15: #{tpu_custom_call.1} parent=11 // pred_region
          _
        $region16: #{tpu_custom_call.1} parent=11 // pred_fallthru
          _
        // Predicated region
        $region17: #{tpu_custom_call.1} parent=11 // pred_check
          %p161 = pneg %p94
        $region18: #{tpu_custom_call.1} parent=11 // pred_check_branch
          %163 = sbr.rel (%p161) target = $region20
        $region19: #{tpu_custom_call.1} parent=11 // pred_region
          _
        $region20: #{tpu_custom_call.1} parent=11 // pred_fallthru
          _
        // Predicated region
        $region21: #{tpu_custom_call.1} parent=11 // pred_check
          %p164 = pneg %p115
        $region22: #{tpu_custom_call.1} parent=11 // pred_check_branch
          %166 = sbr.rel (%p164) target = $region24
        $region23: #{tpu_custom_call.1} parent=11 // pred_region
          _
        $region24: #{tpu_custom_call.1} parent=11 // pred_fallthru
          _
      $region12: #{tpu_custom_call.1} parent=5 // pred_fallthru
        _
      %p167 = scmp.lt.s32.totalorder %s14, 4
      // Predicated region
      $region25: #{tpu_custom_call.1} parent=5 // pred_check
        %p168 = pneg %p167
      $region26: #{tpu_custom_call.1} parent=5 // pred_check_branch
        %170 = sbr.rel (%p168) target = $region28
      $region27: #{tpu_custom_call.1} parent=5 // pred_region
        // Predicated region
        $region29: #{tpu_custom_call.1} parent=27 // pred_check
          %p171 = pneg %p46
        $region30: #{tpu_custom_call.1} parent=27 // pred_check_branch
          %173 = sbr.rel (%p171) target = $region32
        $region31: #{tpu_custom_call.1} parent=27 // pred_region
          %p174 = scmp.lt.s32.totalorder %s21, 1
          %s175 = scalar_select %p174, %s21, 1
          %s176 = smul.addr %s175, 4
          %s177 = smul.addr %s176, 8
          %s178 = scalar_lea.vmem %s0, %s177
        $region32: #{tpu_custom_call.1} parent=27 // pred_fallthru
          _
      $region28: #{tpu_custom_call.1} parent=5 // pred_fallthru
        _
      %p179 = scmp.le.s32.totalorder 1, %s14
      %p180 = scmp.lt.s32.totalorder %s14, 5
      %p181 = pnand %p179, %p180
      %p182 = pneg %p181
      // Predicated region
      $region33: #{tpu_custom_call.1} parent=5 // pred_check
        _
      $region34: #{tpu_custom_call.1} parent=5 // pred_check_branch
        %184 = sbr.rel (%p181) target = $region36
      $region35: #{tpu_custom_call.1} parent=5 // pred_region
        %s185 = ssub.s32 %s14, 1
        %p186 = scmp.lt.s32.totalorder %s23, 1
        %s187 = scalar_select %p186, %s23, 1
        %s188 = smul.addr %s187, 4
        %s189 = smul.addr %s188, 8
        %s190 = scalar_lea.vmem %s0, %s189
        %p191 = pneg %p52
        %p192 = pneg %p49
        %p193 = pneg %p73
        %p194 = pneg %p70
        %p195 = pneg %p94
        %p196 = pneg %p91
        %p197 = pneg %p115
        %p198 = pneg %p112
        %p199 = pneg %p143
        %p200 = pneg %p140
        %s201 = sand.u32 %s130, 1
        %s202 = scalar_lea.sflag [#allocation7], %s201
        %s203 = sand.u32 %s130, 1
        %s204 = smul.addr %s203, 16
        %s205 = scalar_lea.vmem [#allocation6], %s204
        %p206 = scmp.lt.s32.totalorder %s23, 1
        %s207 = scalar_select %p206, %s23, 1
        %s208 = smul.addr %s207, 4
        %s209 = smul.addr %s208, 8
        %s210 = scalar_lea.vmem %s0, %s209
        %p212 = scmp.eq.s32.totalorder %s24, 0
        // Predicated region
        $region37: #{tpu_custom_call.1} parent=35 // pred_check
          %p213 = pneg %p212
        $region38: #{tpu_custom_call.1} parent=35 // pred_check_branch
          %215 = sbr.rel (%p213) target = $region40
        $region39: #{tpu_custom_call.1} parent=35 // pred_region
          loop: start=0, step=1, limit=2
          $region41: #{tpu_custom_call.1} parent=39 // loop_pre_header
            _
          $region42: #{tpu_custom_call.1} parent=39 // loop_header
            %s217 = sphi 0, %s221
            %p218 = scmp.ge.s32.totalorder %s217, 2
          $region43: #{tpu_custom_call.1} parent=39 // loop_header_branch
            %220 = sbr.rel (%p218) target = $region47
          $region44: #{tpu_custom_call.1} parent=39 // loop_body
            %s222 = smul.u32 %s217, 128
            %s223 = sshra.s32 %s222, 7
            %s224 = sand.u32 %s222, 127
            %s225 = smul.addr %s223, 8
            %s226 = scalar_lea.vmem %s210, %s225
            %v227 = vld [vmem:[%s226] sm:$0xff]
            %v228 = vld [vmem:[%s226 + $0x10] sm:$0xff]
            %v229 = vpack.c.bf16 %v228, %v227
            %v230 = vld [vmem:[%s1] sm:$0xf]
            %v231 = vld [vmem:[%s1 + $0x4] sm:$0xf]
            %v232 = vld [vmem:[%s1 + $0x8] sm:$0xf]
            %v233 = vld [vmem:[%s1 + $0xc] sm:$0xf]
            %v234 = vld [vmem:[%s1 + $0x10] sm:$0xf]
            %v235 = vld [vmem:[%s2] sm:$0xff]
            %v236 = vld [vmem:[%s2 + $0x8] sm:$0xff]
            %v237 = vld [vmem:[%s2 + $0x10] sm:$0xff]
            %v238 = vld [vmem:[%s2 + $0x18] sm:$0xff]
            %v239 = vld [vmem:[%s2 + $0x20] sm:$0xff]
            %241 = vset.pattern.permute.xlu0 0
            %242 = vperm.xlu0 %241, %v235
            %v243 = vpop.permute.xlu0 %242
            %246 = vset.pattern.permute.xlu0 0
            %247 = vperm.xlu0 %246, %v236
            %v248 = vpop.permute.xlu0 %247
            %251 = vset.pattern.permute.xlu0 0
            %252 = vperm.xlu0 %251, %v237
            %v253 = vpop.permute.xlu0 %252
            %256 = vset.pattern.permute.xlu0 0
            %257 = vperm.xlu0 %256, %v238
            %v258 = vpop.permute.xlu0 %257
            %261 = vset.pattern.permute.xlu0 0
            %262 = vperm.xlu0 %261, %v239
            %v263 = vpop.permute.xlu0 %262
            %v270 = vunpack.c.l.b16 %v230
            %v271 = vunpack.c.l.b16 %v231
            %v272 = vunpack.c.l.b16 %v232
            %v273 = vunpack.c.l.b16 %v233
            %v274 = vunpack.c.l.b16 %v234
            %v275 = vpack.c.b16 %v271, %v270
            %v276 = vpack.c.b16 %v273, %v272
            %v277 = vpack.c.b16 %v274, %v274
            %vm278 = vcmask 130048
            %v280 = vsel %vm278, %v275, 0
            %v283 = vsel %vm278, %v276, 0
            %v286 = vsel %vm278, %v277, 0
            %288 = vmatprep.subr.bf16.mxu0 0
            %289 = vmatpush1.bf16.msra.mxu0 0
            %290 = vmatprep.subr.bf16.mxu0 0
            %291 = vmatpush1.bf16.msra.mxu0 0
            %292 = vmatprep.subr.bf16.mxu0 0
            %293 = vmatpush1.bf16.msra.mxu0 0
            %294 = vmatprep.subr.bf16.mxu0 0
            %295 = vmatpush1.bf16.msra.mxu0 0
            %296 = vmatprep.subr.bf16.mxu0 0
            %297 = vmatpush1.bf16.msra.mxu0 0
            %298 = vmatprep.subr.bf16.mxu0 0
            %299 = vmatpush1.bf16.msra.mxu0 0
            %300 = vmatprep.subr.bf16.mxu0 0
            %301 = vmatpush1.bf16.msra.mxu0 0
            %302 = vmatprep.subr.bf16.mxu0 0
            %303 = vmatpush1.bf16.msra.mxu0 %v229
            %304 = vmatprep.subr.bf16.mxu0 0
            %305 = vmatpush2.bf16.msra.mxu0 0
            %306 = vmatprep.subr.bf16.mxu0 0
            %307 = vmatpush2.bf16.msra.mxu0 0
            %308 = vmatprep.subr.bf16.mxu0 0
            %309 = vmatpush2.bf16.msra.mxu0 0
            %310 = vmatprep.subr.bf16.mxu0 0
            %311 = vmatpush2.bf16.msra.mxu0 0
            %312 = vmatprep.subr.bf16.mxu0 0
            %313 = vmatpush2.bf16.msra.mxu0 0
            %314 = vmatprep.subr.bf16.mxu0 0
            %315 = vmatpush2.bf16.msra.mxu0 0
            %316 = vmatprep.subr.bf16.mxu0 0
            %317 = vmatpush2.bf16.msra.mxu0 0
            %318 = vmatprep.subr.bf16.mxu0 0
            %319 = vmatpush2.bf16.msra.mxu0 0
            %320 = vmatprep.mubr.bf16.mxu0 0
            %321 = vmatmul.mubr.bf16.gmra.mxu0 %v280
            %v322 = vpop.f32.mrf.mxu0
            %v323 = vadd.f32 %v243, %v322
            %v324 = vpop.f32.mrf.mxu0
            %v325 = vpop.f32.mrf.mxu0
            %v326 = vadd.f32 %v248, %v325
            %v327 = vpop.f32.mrf.mxu0
            %328 = vmatprep.mubr.bf16.mxu0 0
            %329 = vmatmul.mubr.bf16.gmra.mxu0 %v283
            %v330 = vpop.f32.mrf.mxu0
            %v331 = vadd.f32 %v253, %v330
            %v332 = vpop.f32.mrf.mxu0
            %v333 = vpop.f32.mrf.mxu0
            %v334 = vadd.f32 %v258, %v333
            %v335 = vpop.f32.mrf.mxu0
            %336 = vmatprep.mubr.bf16.mxu0 0
            %337 = vmatmul.mubr.bf16.gmra.mxu0 %v286
            %v338 = vpop.f32.mrf.mxu0
            %v339 = vadd.f32 %v263, %v338
            %v340 = vpop.f32.mrf.mxu0
            %v341 = vpop.f32.mrf.mxu0
            %v342 = vpop.f32.mrf.mxu0
            %343 = vdwg.mxu0
            %v344 = vpack.c.bf16 %v323, %v323
            %s345 = smul.addr %s223, 4
            %s346 = scalar_lea.vmem [#allocation2], %s345
            %347 = vst [vmem:[%s346] sm:$0xf] %v344
            %v348 = vpack.c.bf16 %v326, %v326
            %s349 = smul.addr %s223, 4
            %s350 = scalar_lea.vmem [#allocation3], %s349
            %351 = vst [vmem:[%s350] sm:$0xf] %v348
            %v352 = vpack.c.bf16 %v334, %v331
            %v353 = vpack.c.bf16 %v339, %v339
            %v356 = vunpack.c.l.b16 %v352
            %v357 = vunpack.c.h.b16 %v352
            %v358 = vunpack.c.l.b16 %v353
            %v359 = vpack.c.b16 %v356, %v356
            %v360 = vpack.c.b16 %v357, %v357
            %v361 = vpack.c.b16 %v358, %v358
            %s365 = smul.addr %s223, 4
            %s366 = scalar_lea.vmem [#allocation4], %s365
            %367 = vst [vmem:[%s366] sm:$0xf] %v359
            %368 = vst [vmem:[%s366 + $0x8] sm:$0xf] %v360
            %369 = vst [vmem:[%s366 + $0x10] sm:$0xf] %v361
          $region45: #{tpu_custom_call.1} parent=39 // loop_footer
            %s221 = sadd.s32 1, %s217
          $region46: #{tpu_custom_call.1} parent=39 // loop_footer_branch
            %216 = sbr.rel target = $region42
          $region47: #{tpu_custom_call.1} parent=39 // loop_exit
            _
        $region40: #{tpu_custom_call.1} parent=35 // pred_fallthru
          _
        %s370 = smul.u32 %s24, 128
        %s371 = sshra.s32 %s370, 7
        %s372 = sand.u32 %s370, 127
        %s373 = smul.addr %s371, 4
        %s374 = scalar_lea.vmem [#allocation2], %s373
        %v375 = vld [vmem:[%s374] sm:$0xf]
        %v376 = vld [vmem:[#allocation3] sm:$0xff]
        %377 = vxpose.xlu0.c.b16.start [1/8] %v375, 128
        %378 = vxpose.xlu0.c.b16.cont [2/8] 0, 128
        %379 = vxpose.xlu0.c.b16.cont [3/8] 0, 128
        %380 = vxpose.xlu0.c.b16.cont [4/8] 0, 128
        %381 = vxpose.xlu0.c.b16.cont [5/8] 0, 128
        %382 = vxpose.xlu0.c.b16.cont [6/8] 0, 128
        %383 = vxpose.xlu0.c.b16.cont [7/8] 0, 128
        %384 = vxpose.xlu0.c.b16.end [8/8] 0, 128
        %v385 = vpop.trf.xlu0
        %v386 = vpop.trf.xlu0
        %v387 = vpop.trf.xlu0
        %v388 = vpop.trf.xlu0
        %v389 = vpop.trf.xlu0
        %v390 = vpop.trf.xlu0
        %v391 = vpop.trf.xlu0
        %v392 = vpop.trf.xlu0
        %v394 = vunpack.c.l.b16 %v376
        %v395 = vunpack.c.h.b16 %v376
        %v396 = vpack.c.b16 %v394, %v394
        %v397 = vpack.c.b16 %v395, %v395
        %vm398 = vcmask 64512
        %v400 = vsel %vm398, %v385, 0
        %v403 = vsel %vm398, %v386, 0
        %v406 = vsel %vm398, %v387, 0
        %v409 = vsel %vm398, %v388, 0
        %v412 = vsel %vm398, %v389, 0
        %v415 = vsel %vm398, %v390, 0
        %v418 = vsel %vm398, %v391, 0
        %v421 = vsel %vm398, %v392, 0
        %vm423 = vcmask 1043456
        %v425 = vsel %vm423, %v396, 0
        %v428 = vsel %vm423, %v397, 0
        %430 = vmatprep.subr.bf16.mxu0 0
        %431 = vmatpush1.bf16.msra.mxu0 0
        %432 = vmatprep.subr.bf16.mxu0 0
        %433 = vmatpush1.bf16.msra.mxu0 0
        %434 = vmatprep.subr.bf16.mxu0 0
        %435 = vmatpush1.bf16.msra.mxu0 0
        %436 = vmatprep.subr.bf16.mxu0 0
        %437 = vmatpush1.bf16.msra.mxu0 0
        %438 = vmatprep.subr.bf16.mxu0 0
        %439 = vmatpush1.bf16.msra.mxu0 0
        %440 = vmatprep.subr.bf16.mxu0 0
        %441 = vmatpush1.bf16.msra.mxu0 0
        %442 = vmatprep.subr.bf16.mxu0 0
        %443 = vmatpush1.bf16.msra.mxu0 0
        %444 = vmatprep.subr.bf16.mxu0 %v428
        %445 = vmatpush1.bf16.msra.mxu0 %v425
        %446 = vmatprep.subr.bf16.mxu0 0
        %447 = vmatpush2.bf16.msra.mxu0 0
        %448 = vmatprep.subr.bf16.mxu0 0
        %449 = vmatpush2.bf16.msra.mxu0 0
        %450 = vmatprep.subr.bf16.mxu0 0
        %451 = vmatpush2.bf16.msra.mxu0 0
        %452 = vmatprep.subr.bf16.mxu0 0
        %453 = vmatpush2.bf16.msra.mxu0 0
        %454 = vmatprep.subr.bf16.mxu0 0
        %455 = vmatpush2.bf16.msra.mxu0 0
        %456 = vmatprep.subr.bf16.mxu0 0
        %457 = vmatpush2.bf16.msra.mxu0 0
        %458 = vmatprep.subr.bf16.mxu0 0
        %459 = vmatpush2.bf16.msra.mxu0 0
        %460 = vmatprep.subr.bf16.mxu0 0
        %461 = vmatpush2.bf16.msra.mxu0 0
        %462 = vmatprep.mubr.bf16.mxu0 0
        %463 = vmatmul.mubr.bf16.gmra.mxu0 %v400
        %v464 = vpop.f32.mrf.mxu0
        %v465 = vadd.f32 0.0, %v464
        %v466 = vpop.f32.mrf.mxu0
        %v467 = vadd.f32 0.0, %v466
        %v468 = vpop.f32.mrf.mxu0
        %v469 = vadd.f32 0.0, %v468
        %v470 = vpop.f32.mrf.mxu0
        %v471 = vadd.f32 0.0, %v470
        %472 = vmatprep.mubr.bf16.mxu0 0
        %473 = vmatmul.mubr.bf16.gmra.mxu0 %v403
        %v474 = vpop.f32.mrf.mxu0
        %v475 = vadd.f32 0.0, %v474
        %v476 = vpop.f32.mrf.mxu0
        %v477 = vadd.f32 0.0, %v476
        %v478 = vpop.f32.mrf.mxu0
        %v479 = vadd.f32 0.0, %v478
        %v480 = vpop.f32.mrf.mxu0
        %v481 = vadd.f32 0.0, %v480
        %482 = vmatprep.mubr.bf16.mxu0 0
        %483 = vmatmul.mubr.bf16.gmra.mxu0 %v406
        %v484 = vpop.f32.mrf.mxu0
        %v485 = vadd.f32 0.0, %v484
        %v486 = vpop.f32.mrf.mxu0
        %v487 = vadd.f32 0.0, %v486
        %v488 = vpop.f32.mrf.mxu0
        %v489 = vadd.f32 0.0, %v488
        %v490 = vpop.f32.mrf.mxu0
        %v491 = vadd.f32 0.0, %v490
        %492 = vmatprep.mubr.bf16.mxu0 0
        %493 = vmatmul.mubr.bf16.gmra.mxu0 %v409
        %v494 = vpop.f32.mrf.mxu0
        %v495 = vadd.f32 0.0, %v494
        %v496 = vpop.f32.mrf.mxu0
        %v497 = vadd.f32 0.0, %v496
        %v498 = vpop.f32.mrf.mxu0
        %v499 = vadd.f32 0.0, %v498
        %v500 = vpop.f32.mrf.mxu0
        %v501 = vadd.f32 0.0, %v500
        %502 = vmatprep.mubr.bf16.mxu0 0
        %503 = vmatmul.mubr.bf16.gmra.mxu0 %v412
        %v504 = vpop.f32.mrf.mxu0
        %v505 = vadd.f32 0.0, %v504
        %v506 = vpop.f32.mrf.mxu0
        %v507 = vadd.f32 0.0, %v506
        %v508 = vpop.f32.mrf.mxu0
        %v509 = vadd.f32 0.0, %v508
        %v510 = vpop.f32.mrf.mxu0
        %v511 = vadd.f32 0.0, %v510
        %512 = vmatprep.mubr.bf16.mxu0 0
        %513 = vmatmul.mubr.bf16.gmra.mxu0 %v415
        %v514 = vpop.f32.mrf.mxu0
        %v515 = vadd.f32 0.0, %v514
        %v516 = vpop.f32.mrf.mxu0
        %v517 = vadd.f32 0.0, %v516
        %v518 = vpop.f32.mrf.mxu0
        %v519 = vadd.f32 0.0, %v518
        %v520 = vpop.f32.mrf.mxu0
        %v521 = vadd.f32 0.0, %v520
        %522 = vmatprep.mubr.bf16.mxu0 0
        %523 = vmatmul.mubr.bf16.gmra.mxu0 %v418
        %v524 = vpop.f32.mrf.mxu0
        %v525 = vadd.f32 0.0, %v524
        %v526 = vpop.f32.mrf.mxu0
        %v527 = vadd.f32 0.0, %v526
        %v528 = vpop.f32.mrf.mxu0
        %v529 = vadd.f32 0.0, %v528
        %v530 = vpop.f32.mrf.mxu0
        %v531 = vadd.f32 0.0, %v530
        %532 = vmatprep.mubr.bf16.mxu0 0
        %533 = vmatmul.mubr.bf16.gmra.mxu0 %v421
        %v534 = vpop.f32.mrf.mxu0
        %v535 = vadd.f32 0.0, %v534
        %v536 = vpop.f32.mrf.mxu0
        %v537 = vadd.f32 0.0, %v536
        %v538 = vpop.f32.mrf.mxu0
        %v539 = vadd.f32 0.0, %v538
        %v540 = vpop.f32.mrf.mxu0
        %v541 = vadd.f32 0.0, %v540
        %542 = vdwg.mxu0
        %v543 = vmax.f32 %v465, %v467
        %544 = vmax.xlane.f32.xlu0 %v543
        %v545 = vpop.xlane.xlu0 %544
        %v546 = vmax.f32 %v469, %v471
        %547 = vmax.xlane.f32.xlu0 %v546
        %v548 = vpop.xlane.xlu0 %547
        %v549 = vmax.f32 %v475, %v477
        %550 = vmax.xlane.f32.xlu0 %v549
        %v551 = vpop.xlane.xlu0 %550
        %v552 = vmax.f32 %v479, %v481
        %553 = vmax.xlane.f32.xlu0 %v552
        %v554 = vpop.xlane.xlu0 %553
        %v555 = vmax.f32 %v485, %v487
        %556 = vmax.xlane.f32.xlu0 %v555
        %v557 = vpop.xlane.xlu0 %556
        %v558 = vmax.f32 %v489, %v491
        %559 = vmax.xlane.f32.xlu0 %v558
        %v560 = vpop.xlane.xlu0 %559
        %v561 = vmax.f32 %v495, %v497
        %562 = vmax.xlane.f32.xlu0 %v561
        %v563 = vpop.xlane.xlu0 %562
        %v564 = vmax.f32 %v499, %v501
        %565 = vmax.xlane.f32.xlu0 %v564
        %v566 = vpop.xlane.xlu0 %565
        %v567 = vmax.f32 %v505, %v507
        %568 = vmax.xlane.f32.xlu0 %v567
        %v569 = vpop.xlane.xlu0 %568
        %v570 = vmax.f32 %v509, %v511
        %571 = vmax.xlane.f32.xlu0 %v570
        %v572 = vpop.xlane.xlu0 %571
        %v573 = vmax.f32 %v515, %v517
        %574 = vmax.xlane.f32.xlu0 %v573
        %v575 = vpop.xlane.xlu0 %574
        %v576 = vmax.f32 %v519, %v521
        %577 = vmax.xlane.f32.xlu0 %v576
        %v578 = vpop.xlane.xlu0 %577
        %v579 = vmax.f32 %v525, %v527
        %580 = vmax.xlane.f32.xlu0 %v579
        %v581 = vpop.xlane.xlu0 %580
        %v582 = vmax.f32 %v529, %v531
        %583 = vmax.xlane.f32.xlu0 %v582
        %v584 = vpop.xlane.xlu0 %583
        %v585 = vmax.f32 %v535, %v537
        %586 = vmax.xlane.f32.xlu0 %v585
        %v587 = vpop.xlane.xlu0 %586
        %v588 = vmax.f32 %v539, %v541
        %589 = vmax.xlane.f32.xlu0 %v588
        %v590 = vpop.xlane.xlu0 %589
        %v591 = vsub.f32 %v465, %v545
        %v592 = vsub.f32 %v467, %v545
        %v593 = vsub.f32 %v469, %v548
        %v594 = vsub.f32 %v471, %v548
        %v595 = vsub.f32 %v475, %v551
        %v596 = vsub.f32 %v477, %v551
        %v597 = vsub.f32 %v479, %v554
        %v598 = vsub.f32 %v481, %v554
        %v599 = vsub.f32 %v485, %v557
        %v600 = vsub.f32 %v487, %v557
        %v601 = vsub.f32 %v489, %v560
        %v602 = vsub.f32 %v491, %v560
        %v603 = vsub.f32 %v495, %v563
        %v604 = vsub.f32 %v497, %v563
        %v605 = vsub.f32 %v499, %v566
        %v606 = vsub.f32 %v501, %v566
        %v607 = vsub.f32 %v505, %v569
        %v608 = vsub.f32 %v507, %v569
        %v609 = vsub.f32 %v509, %v572
        %v610 = vsub.f32 %v511, %v572
        %v611 = vsub.f32 %v515, %v575
        %v612 = vsub.f32 %v517, %v575
        %v613 = vsub.f32 %v519, %v578
        %v614 = vsub.f32 %v521, %v578
        %v615 = vsub.f32 %v525, %v581
        %v616 = vsub.f32 %v527, %v581
        %v617 = vsub.f32 %v529, %v584
        %v618 = vsub.f32 %v531, %v584
        %v619 = vsub.f32 %v535, %v587
        %v620 = vsub.f32 %v537, %v587
        %v621 = vsub.f32 %v539, %v590
        %v622 = vsub.f32 %v541, %v590
        %v623 = vmul.f32 %v591, 1.442695
        %v624 = vpow.pop %v623
        %v625 = vmul.f32 %v592, 1.442695
        %v626 = vpow.pop %v625
        %v627 = vmul.f32 %v593, 1.442695
        %v628 = vpow.pop %v627
        %v629 = vmul.f32 %v594, 1.442695
        %v630 = vpow.pop %v629
        %v631 = vmul.f32 %v595, 1.442695
        %v632 = vpow.pop %v631
        %v633 = vmul.f32 %v596, 1.442695
        %v634 = vpow.pop %v633
        %v635 = vmul.f32 %v597, 1.442695
        %v636 = vpow.pop %v635
        %v637 = vmul.f32 %v598, 1.442695
        %v638 = vpow.pop %v637
        %v639 = vmul.f32 %v599, 1.442695
        %v640 = vpow.pop %v639
        %v641 = vmul.f32 %v600, 1.442695
        %v642 = vpow.pop %v641
        %v643 = vmul.f32 %v601, 1.442695
        %v644 = vpow.pop %v643
        %v645 = vmul.f32 %v602, 1.442695
        %v646 = vpow.pop %v645
        %v647 = vmul.f32 %v603, 1.442695
        %v648 = vpow.pop %v647
        %v649 = vmul.f32 %v604, 1.442695
        %v650 = vpow.pop %v649
        %v651 = vmul.f32 %v605, 1.442695
        %v652 = vpow.pop %v651
        %v653 = vmul.f32 %v606, 1.442695
        %v654 = vpow.pop %v653
        %v655 = vmul.f32 %v607, 1.442695
        %v656 = vpow.pop %v655
        %v657 = vmul.f32 %v608, 1.442695
        %v658 = vpow.pop %v657
        %v659 = vmul.f32 %v609, 1.442695
        %v660 = vpow.pop %v659
        %v661 = vmul.f32 %v610, 1.442695
        %v662 = vpow.pop %v661
        %v663 = vmul.f32 %v611, 1.442695
        %v664 = vpow.pop %v663
        %v665 = vmul.f32 %v612, 1.442695
        %v666 = vpow.pop %v665
        %v667 = vmul.f32 %v613, 1.442695
        %v668 = vpow.pop %v667
        %v669 = vmul.f32 %v614, 1.442695
        %v670 = vpow.pop %v669
        %v671 = vmul.f32 %v615, 1.442695
        %v672 = vpow.pop %v671
        %v673 = vmul.f32 %v616, 1.442695
        %v674 = vpow.pop %v673
        %v675 = vmul.f32 %v617, 1.442695
        %v676 = vpow.pop %v675
        %v677 = vmul.f32 %v618, 1.442695
        %v678 = vpow.pop %v677
        %v679 = vmul.f32 %v619, 1.442695
        %v680 = vpow.pop %v679
        %v681 = vmul.f32 %v620, 1.442695
        %v682 = vpow.pop %v681
        %v683 = vmul.f32 %v621, 1.442695
        %v684 = vpow.pop %v683
        %v685 = vmul.f32 %v622, 1.442695
        %v686 = vpow.pop %v685
        %v687 = vpack.c.bf16 %v628, %v624
        %v688 = vpack.c.bf16 %v630, %v626
        %v689 = vpack.c.bf16 %v636, %v632
        %v690 = vpack.c.bf16 %v638, %v634
        %v691 = vpack.c.bf16 %v644, %v640
        %v692 = vpack.c.bf16 %v646, %v642
        %v693 = vpack.c.bf16 %v652, %v648
        %v694 = vpack.c.bf16 %v654, %v650
        %v695 = vpack.c.bf16 %v660, %v656
        %v696 = vpack.c.bf16 %v662, %v658
        %v697 = vpack.c.bf16 %v668, %v664
        %v698 = vpack.c.bf16 %v670, %v666
        %v699 = vpack.c.bf16 %v676, %v672
        %v700 = vpack.c.bf16 %v678, %v674
        %v701 = vpack.c.bf16 %v684, %v680
        %v702 = vpack.c.bf16 %v686, %v682
        %v703 = vld [vmem:[#allocation4] sm:$0xff]
        %v704 = vld [vmem:[#allocation4 + $0x8] sm:$0xff]
        %v705 = vld [vmem:[#allocation4 + $0x10] sm:$0xff]
        %v709 = vunpack.c.l.b16 %v703
        %v710 = vunpack.c.h.b16 %v703
        %v711 = vunpack.c.l.b16 %v704
        %v712 = vunpack.c.h.b16 %v704
        %v713 = vunpack.c.l.b16 %v705
        %v714 = vunpack.c.h.b16 %v705
        %v715 = vpack.c.b16 %v711, %v709
        %v716 = vpack.c.b16 %v712, %v710
        %v717 = vpack.c.b16 %v713, %v713
        %v718 = vpack.c.b16 %v714, %v714
        %723 = vmatprep.subr.bf16.mxu0 %v702
        %724 = vmatpush1.bf16.xpose.msra.mxu0 %v701
        %725 = vmatprep.subr.bf16.mxu0 %v700
        %726 = vmatpush1.bf16.xpose.msra.mxu0 %v699
        %727 = vmatprep.subr.bf16.mxu0 %v698
        %728 = vmatpush1.bf16.xpose.msra.mxu0 %v697
        %729 = vmatprep.subr.bf16.mxu0 %v696
        %730 = vmatpush1.bf16.xpose.msra.mxu0 %v695
        %731 = vmatprep.subr.bf16.mxu0 %v694
        %732 = vmatpush1.bf16.xpose.msra.mxu0 %v693
        %733 = vmatprep.subr.bf16.mxu0 %v692
        %734 = vmatpush1.bf16.xpose.msra.mxu0 %v691
        %735 = vmatprep.subr.bf16.mxu0 %v690
        %736 = vmatpush1.bf16.xpose.msra.mxu0 %v689
        %737 = vmatprep.subr.bf16.mxu0 %v688
        %738 = vmatpush1.bf16.xpose.msra.mxu0 %v687
        %739 = vmatprep.subr.bf16.mxu0 0
        %740 = vmatpush2.bf16.xpose.msra.mxu0 0
        %741 = vmatprep.subr.bf16.mxu0 0
        %742 = vmatpush2.bf16.xpose.msra.mxu0 0
        %743 = vmatprep.subr.bf16.mxu0 0
        %744 = vmatpush2.bf16.xpose.msra.mxu0 0
        %745 = vmatprep.subr.bf16.mxu0 0
        %746 = vmatpush2.bf16.xpose.msra.mxu0 0
        %747 = vmatprep.subr.bf16.mxu0 0
        %748 = vmatpush2.bf16.xpose.msra.mxu0 0
        %749 = vmatprep.subr.bf16.mxu0 0
        %750 = vmatpush2.bf16.xpose.msra.mxu0 0
        %751 = vmatprep.subr.bf16.mxu0 0
        %752 = vmatpush2.bf16.xpose.msra.mxu0 0
        %753 = vmatprep.subr.bf16.mxu0 0
        %754 = vmatpush2.bf16.xpose.msra.mxu0 0
        %755 = vmatprep.mubr.bf16.mxu0 %v716
        %756 = vmatmul.mubr.bf16.gmra.mxu0 %v715
        %v757 = vpop.f32.mrf.mxu0
        %v758 = vadd.f32 0.0, %v757
        %v759 = vpop.f32.mrf.mxu0
        %v760 = vpop.f32.mrf.mxu0
        %v761 = vadd.f32 0.0, %v760
        %v762 = vpop.f32.mrf.mxu0
        %763 = vmatprep.mubr.bf16.mxu0 %v718
        %764 = vmatmul.mubr.bf16.gmra.mxu0 %v717
        %v765 = vpop.f32.mrf.mxu0
        %v766 = vadd.f32 0.0, %v765
        %v767 = vpop.f32.mrf.mxu0
        %v768 = vpop.f32.mrf.mxu0
        %v769 = vpop.f32.mrf.mxu0
        %770 = vdwg.mxu0
        %s771 = sld [smem:[#allocation5]]
        %v772 = vrcp.pop %v766
        %v773 = vstv %s771
        %v774 = vmul.f32 %v773, %v772
        %s775 = smul.addr %s371, 8
        %s776 = scalar_lea.vmem %s210, %s775
        %v777 = vld [vmem:[%s776] sm:$0xff]
        %v778 = vld [vmem:[%s776 + $0x10] sm:$0xff]
        %v779 = vlaneseq
        %v780 = vshrl.u32 %v779, 7
        %v781 = vsub.s32 0, %v780
        %v782 = vrot.slane %v774, %v781
        %v783 = vmul.f32 %v758, %v782
        %v784 = vmul.f32 %v761, %v782
        %v785 = vadd.f32 %v783, %v777
        %v786 = vadd.f32 %v784, %v778
        %787 = vst [vmem:[%s205] sm:$0xff] %v785
        %788 = vst [vmem:[%s205 + $0x8] sm:$0xff] %v786
        %s789 = sand.u32 %s130, 1
        %s790 = scalar_lea.sflag [#allocation7], %s789
        %s791 = sand.u32 %s130, 1
        %s792 = smul.addr %s791, 16
        %s793 = scalar_lea.vmem [#allocation6], %s792
        // Predicated region
        $region48: #{tpu_custom_call.1} parent=35 // pred_check
          %p794 = pneg %p140
        $region49: #{tpu_custom_call.1} parent=35 // pred_check_branch
          %796 = sbr.rel (%p794) target = $region51
        $region50: #{tpu_custom_call.1} parent=35 // pred_region
          %s798 = ssub.s32 256, 256
          %799 = vsyncadd %s790, %s798
          %s800 = smul.addr %s23, 4
          %s801 = sadd.s32 %s24, %s800
          %s802 = smul.addr %s801, 128
          %s803 = scalar_lea.hbm %s4, %s802
          %s804 = sshll.u32 %s793, 4
          %s805 = int_to_ptr.vmem [resolvable:$true] %s804
          %810 = dma.vmem_to_hbm [thread:$0]  %s805, 256, %s803, %s790, 128, 256, 8
        $region51: #{tpu_custom_call.1} parent=35 // pred_fallthru
          _
      $region36: #{tpu_custom_call.1} parent=5 // pred_fallthru
        _
      %p811 = scmp.le.s32.totalorder 2, %s14
      // Predicated region
      $region52: #{tpu_custom_call.1} parent=5 // pred_check
        %p812 = pneg %p811
      $region53: #{tpu_custom_call.1} parent=5 // pred_check_branch
        %814 = sbr.rel (%p812) target = $region55
      $region54: #{tpu_custom_call.1} parent=5 // pred_region
        %s815 = ssub.s32 %s14, 2
        // Predicated region
        $region56: #{tpu_custom_call.1} parent=54 // pred_check
          %p816 = pneg %p146
        $region57: #{tpu_custom_call.1} parent=54 // pred_check_branch
          %818 = sbr.rel (%p816) target = $region59
        $region58: #{tpu_custom_call.1} parent=54 // pred_region
          %s819 = sand.u32 %s131, 1
          %s820 = scalar_lea.sflag [#allocation7], %s819
          %s821 = sand.u32 %s131, 1
          %s822 = smul.addr %s821, 16
          %s823 = scalar_lea.vmem [#allocation6], %s822
          %824 = dma.done %s820, 256
        $region59: #{tpu_custom_call.1} parent=54 // pred_fallthru
          _
      $region55: #{tpu_custom_call.1} parent=5 // pred_fallthru
        _
    $region6: #{tpu_custom_call.1} parent=1 // loop_footer
      %s18 = sadd.s32 1, %s14
    $region7: #{tpu_custom_call.1} parent=1 // loop_footer_branch
      %13 = sbr.rel target = $region3
    $region8: #{tpu_custom_call.1} parent=1 // loop_exit
      _
    %825 = vsyncpa [#allocation7], 1
    %s826 = scalar_lea.sflag [#allocation7], 1
    %827 = vsyncpa %s826, 1

</llo_original>
